<compile_context>
chip_gen: v7x
topology: tpu7x:2x2x1
jax: 0.10.0
libtpu: 0.0.40
codegen_flags: <defaults>
</compile_context>

<pallas_src>
import functools

import jax
import jax.numpy as jnp
from jax.experimental import pallas as pl
from jax.experimental.pallas import tpu as pltpu


def _attention_kernel(q_ref, kv_ref, wq_ref, wk_ref, wv_ref, wo_ref, bo_ref,
                      o_ref, *, num_heads, head_dim, seq_q, seq_kv, scale,
                      is_causal, compute_dtype):
    inner = num_heads * head_dim
    m_q = q_ref.shape[0]              # Bt * Sq
    bt = m_q // seq_q                 # batch rows fused into this grid step

    x_q = q_ref[...]                  # (Bt*Sq,  q_dim)   compute_dtype
    x_kv = kv_ref[...]                # (Bt*Skv, kv_dim)  compute_dtype

    # Fused full-width projections across all heads and all Bt batch rows
    # (one MXU matmul each, f32 accumulation).
    q_all = jnp.dot(x_q, wq_ref[...], preferred_element_type=jnp.float32)   # (M, inner)
    k_all = jnp.dot(x_kv, wk_ref[...], preferred_element_type=jnp.float32)  # (Mk, inner)
    v_all = jnp.dot(x_kv, wv_ref[...], preferred_element_type=jnp.float32)  # (Mk, inner)

    # Batched (per asset row) view for attention; leading-dim split only.
    q3 = q_all.reshape(bt, seq_q, inner).astype(compute_dtype)
    k3 = k_all.reshape(bt, seq_kv, inner).astype(compute_dtype)
    v3 = v_all.reshape(bt, seq_kv, inner).astype(compute_dtype)

    if is_causal:
        # Matches torch.ones(Sq, Skv).tril(diagonal=0): keep where col <= row.
        row = jax.lax.broadcasted_iota(jnp.int32, (seq_q, seq_kv), 0)
        col = jax.lax.broadcasted_iota(jnp.int32, (seq_q, seq_kv), 1)
        causal_bias = jnp.where(col <= row,
                                jnp.float32(0.0), jnp.float32(-1e30))

    ctx_heads = []
    for h in range(num_heads):        # static unroll; H is small
        lo = h * head_dim
        hi = lo + head_dim
        qh = q3[:, :, lo:hi]          # (Bt, Sq,  d)
        kh = k3[:, :, lo:hi]          # (Bt, Skv, d)
        vh = v3[:, :, lo:hi]          # (Bt, Skv, d)

        # scores = qh @ kh^T per batch row (contract on d; no XLU transpose).
        s = jnp.einsum('bqd,bkd->bqk', qh, kh,
                       preferred_element_type=jnp.float32) * scale          # (Bt,Sq,Skv)
        if is_causal:
            s = s + causal_bias       # additive bias, broadcast over batch

        # Softmax in f32 (v5e has no bf16 VPU/EUP; exact divide for parity).
        s = s - jnp.max(s, axis=-1, keepdims=True)
        p = jnp.exp(s)
        attn = p / jnp.sum(p, axis=-1, keepdims=True)

        ctx_heads.append(
            jnp.einsum('bqk,bkd->bqd', attn.astype(compute_dtype), vh,
                       preferred_element_type=jnp.float32))                 # (Bt,Sq,d)

    # One fused output projection with K = inner_dim, plus bias.
    ctx = jnp.concatenate(ctx_heads, axis=-1).reshape(m_q, inner)           # (M, inner)
    out = jnp.dot(ctx.astype(compute_dtype), wo_ref[...],
                  preferred_element_type=jnp.float32)                       # (M, q_dim)
    out = out + bo_ref[...].astype(jnp.float32)
    o_ref[...] = out.astype(o_ref.dtype)                                    # dense slab store


def _pick_batch_tile(batch, seq_q, min_rows=128, max_rows=512):
    """Largest divisor of `batch` with Bt*Sq <= max_rows, preferring >= min_rows."""
    best = 1
    for bt in range(1, batch + 1):
        if batch % bt:
            continue
        if bt * seq_q <= max_rows:
            best = bt
        if bt * seq_q >= min_rows:
            break
    return best


def attention_pallas(q, kv, wq, wk, wv, wo, bo, *, num_heads, is_causal=False,
                     compute_dtype=jnp.bfloat16, batch_tile=None):
    """Multi-head cross attention matching the PyTorch `Attention.forward`.

    q:  (B, Sq, q_dim)      kv: (B, Skv, kv_dim)
    wq, wk, wv: (num_heads*head_dim, q_dim / kv_dim)   (nn.Linear convention)
    wo: (q_dim, num_heads*head_dim)   bo: (q_dim,)
    """
    B, Sq, q_dim = q.shape
    _, Skv, kv_dim = kv.shape
    inner_dim = wq.shape[0]
    head_dim = inner_dim // num_heads
    scale = float(head_dim) ** -0.5

    bt = batch_tile if batch_tile is not None else _pick_batch_tile(B, Sq)
    assert B % bt == 0, "batch tile must divide batch"
    nb = B // bt

    # Wrapper-side layout plumbing: flatten batch*seq into matmul M rows,
    # pre-transpose weights (x @ W_t, no in-kernel .T), cast operands to the
    # MXU-native compute dtype (bf16 by default; f32 accumulate in-kernel).
    q2 = q.reshape(B * Sq, q_dim).astype(compute_dtype)
    kv2 = kv.reshape(B * Skv, kv_dim).astype(compute_dtype)
    wq_t = wq.T.astype(compute_dtype)            # (q_dim,  inner)
    wk_t = wk.T.astype(compute_dtype)            # (kv_dim, inner)
    wv_t = wv.T.astype(compute_dtype)            # (kv_dim, inner)
    wo_t = wo.T.astype(compute_dtype)            # (inner,  q_dim)
    bo2d = bo.reshape(1, q_dim).astype(jnp.float32)

    kernel = functools.partial(
        _attention_kernel, num_heads=num_heads, head_dim=head_dim,
        seq_q=Sq, seq_kv=Skv, scale=scale, is_causal=is_causal,
        compute_dtype=compute_dtype)

    out2 = pl.pallas_call(
        kernel,
        out_shape=jax.ShapeDtypeStruct((B * Sq, q_dim), q.dtype),
        grid_spec=pltpu.PrefetchScalarGridSpec(
            num_scalar_prefetch=0,
            grid=(nb,),
            in_specs=[
                pl.BlockSpec((bt * Sq, q_dim), lambda b: (b, 0)),        # q rows
                pl.BlockSpec((bt * Skv, kv_dim), lambda b: (b, 0)),      # kv rows
                # Whole weights with constant index maps: DMA'd once, VMEM-resident.
                pl.BlockSpec((q_dim, inner_dim), lambda b: (0, 0)),      # Wq^T
                pl.BlockSpec((kv_dim, inner_dim), lambda b: (0, 0)),     # Wk^T
                pl.BlockSpec((kv_dim, inner_dim), lambda b: (0, 0)),     # Wv^T
                pl.BlockSpec((inner_dim, q_dim), lambda b: (0, 0)),      # Wo^T
                pl.BlockSpec((1, q_dim), lambda b: (0, 0)),              # bias
            ],
            out_specs=pl.BlockSpec((bt * Sq, q_dim), lambda b: (b, 0)),
        ),
        compiler_params=pltpu.CompilerParams(
            dimension_semantics=("parallel",)),
    )(q2, kv2, wq_t, wk_t, wv_t, wo_t, bo2d)

    return out2.reshape(B, Sq, q_dim)


def attention_reference(q, kv, wq, wk, wv, wo, bo, *, num_heads, is_causal=False):
    """Pure-JAX reference mirroring the PyTorch forward (f32 end-to-end)."""
    B, Sq, _ = q.shape
    _, Skv, _ = kv.shape
    inner = wq.shape[0]
    d = inner // num_heads
    scale = float(d) ** -0.5

    def split_heads(x):  # (B, S, H*d) -> (B*H, S, d)
        B_, S_, _ = x.shape
        return x.reshape(B_, S_, num_heads, d).transpose(0, 2, 1, 3).reshape(
            B_ * num_heads, S_, d)

    query = split_heads(q @ wq.T)
    key = split_heads(kv @ wk.T)
    value = split_heads(kv @ wv.T)
    scores = jnp.einsum('bid,bjd->bij', query, key) * scale
    if is_causal:
        mask = jnp.tril(jnp.ones((Sq, Skv), dtype=bool))
        scores = jnp.where(mask, scores, -jnp.inf)
    attn = jax.nn.softmax(scores, axis=-1)
    out = jnp.einsum('bij,bjd->bid', attn, value)
    out = out.reshape(B, num_heads, Sq, d).transpose(0, 2, 1, 3).reshape(B, Sq, inner)
    return out @ wo.T + bo


if __name__ == "__main__":
    # Small shapes consistent with the module's forward.
    asset_dim = 2      # batch
    window = 8         # seq len for both q and kv
    q_dim = 32
    kv_dim = 32
    num_heads = 4
    head_dim = 16
    inner_dim = num_heads * head_dim

    key = jax.random.PRNGKey(0)
    k_q, k_kv, k_wq, k_wk, k_wv, k_wo, k_bo = jax.random.split(key, 7)

    q = jax.random.normal(k_q, (asset_dim, window, q_dim), dtype=jnp.float32)
    kv = jax.random.normal(k_kv, (asset_dim, window, kv_dim), dtype=jnp.float32)

    # Deterministic parameter init (Linear weight convention: (out, in)).
    wq = jax.random.normal(k_wq, (inner_dim, q_dim), dtype=jnp.float32) * 0.05
    wk = jax.random.normal(k_wk, (inner_dim, kv_dim), dtype=jnp.float32) * 0.05
    wv = jax.random.normal(k_wv, (inner_dim, kv_dim), dtype=jnp.float32) * 0.05
    wo = jax.random.normal(k_wo, (q_dim, inner_dim), dtype=jnp.float32) * 0.05
    bo = jax.random.normal(k_bo, (q_dim,), dtype=jnp.float32) * 0.05

    ref = attention_reference(q, kv, wq, wk, wv, wo, bo, num_heads=num_heads)

    # f32 compute path: tight parity with the reference.
    out_f32 = jax.block_until_ready(attention_pallas(
        q, kv, wq, wk, wv, wo, bo, num_heads=num_heads,
        compute_dtype=jnp.float32))
    assert out_f32.shape == (asset_dim, window, q_dim)
    assert jnp.allclose(out_f32, ref, atol=2e-3, rtol=2e-3), "f32 mismatch vs reference"

    # bf16 compute path (default, MXU-native): relaxed tolerance for bf16 operands.
    out_bf16 = jax.block_until_ready(attention_pallas(
        q, kv, wq, wk, wv, wo, bo, num_heads=num_heads))
    assert out_bf16.shape == (asset_dim, window, q_dim)
    assert jnp.allclose(out_bf16, ref, atol=2e-2, rtol=2e-2), "bf16 mismatch vs reference"

    # Causal path.
    ref_c = attention_reference(q, kv, wq, wk, wv, wo, bo,
                                num_heads=num_heads, is_causal=True)
    out_c = jax.block_until_ready(attention_pallas(
        q, kv, wq, wk, wv, wo, bo, num_heads=num_heads, is_causal=True))
    assert jnp.allclose(out_c, ref_c, atol=2e-2, rtol=2e-2), "causal mismatch"

    print("KERNEL_OK")
</pallas_src>

<mosaic_0001>
module attributes {stable_mosaic.version = 11 : i64} {
  func.func @_attention_kernel(%arg0: i32, %arg1: memref<16x32xf32, #tpu.memory_space<vmem>>, %arg2: memref<16x32xf32, #tpu.memory_space<vmem>>, %arg3: memref<32x64xf32, #tpu.memory_space<vmem>>, %arg4: memref<32x64xf32, #tpu.memory_space<vmem>>, %arg5: memref<32x64xf32, #tpu.memory_space<vmem>>, %arg6: memref<64x32xf32, #tpu.memory_space<vmem>>, %arg7: memref<1x32xf32, #tpu.memory_space<vmem>>, %arg8: memref<16x32xf32, #tpu.memory_space<vmem>>) attributes {dimension_semantics = [#tpu.dimension_semantics<parallel>], iteration_bounds = array<i64: 1>, scalar_prefetch = 0 : i64, scratch_operands = 0 : i64, tpu.core_type = #tpu.core_type<tc>, window_params = [{transform_indices = @transform_0, window_bounds = array<i64: 16, 32>}, {transform_indices = @transform_1, window_bounds = array<i64: 16, 32>}, {pipeline_mode = #tpu.pipeline_mode<synchronous>, transform_indices = @transform_2, window_bounds = array<i64: 32, 64>}, {pipeline_mode = #tpu.pipeline_mode<synchronous>, transform_indices = @transform_3, window_bounds = array<i64: 32, 64>}, {pipeline_mode = #tpu.pipeline_mode<synchronous>, transform_indices = @transform_4, window_bounds = array<i64: 32, 64>}, {pipeline_mode = #tpu.pipeline_mode<synchronous>, transform_indices = @transform_5, window_bounds = array<i64: 64, 32>}, {pipeline_mode = #tpu.pipeline_mode<synchronous>, transform_indices = @transform_6, window_bounds = array<i64: 1, 32>}, {transform_indices = @transform_7, window_bounds = array<i64: 16, 32>}]} {
    %c0 = arith.constant 0 : index
    %c0_0 = arith.constant 0 : index
    %0 = vector.load %arg1[%c0, %c0_0] : memref<16x32xf32, #tpu.memory_space<vmem>>, vector<16x32xf32>
    %c0_1 = arith.constant 0 : index
    %c0_2 = arith.constant 0 : index
    %1 = vector.load %arg2[%c0_1, %c0_2] : memref<16x32xf32, #tpu.memory_space<vmem>>, vector<16x32xf32>
    %c0_3 = arith.constant 0 : index
    %c0_4 = arith.constant 0 : index
    %2 = vector.load %arg3[%c0_3, %c0_4] : memref<32x64xf32, #tpu.memory_space<vmem>>, vector<32x64xf32>
    %cst = arith.constant dense<0.000000e+00> : vector<16x64xf32>
    %3 = tpu.matmul %0, %2, %cst {dimension_numbers = #tpu.dot_dimension_numbers<[1], [0], [0], [1], [0, 0, 1, 1], [], []>} : vector<16x32xf32>, vector<32x64xf32>, vector<16x64xf32> -> vector<16x64xf32>
    %c0_5 = arith.constant 0 : index
    %c0_6 = arith.constant 0 : index
    %4 = vector.load %arg4[%c0_5, %c0_6] : memref<32x64xf32, #tpu.memory_space<vmem>>, vector<32x64xf32>
    %cst_7 = arith.constant dense<0.000000e+00> : vector<16x64xf32>
    %5 = tpu.matmul %1, %4, %cst_7 {dimension_numbers = #tpu.dot_dimension_numbers<[1], [0], [0], [1], [0, 0, 1, 1], [], []>} : vector<16x32xf32>, vector<32x64xf32>, vector<16x64xf32> -> vector<16x64xf32>
    %c0_8 = arith.constant 0 : index
    %c0_9 = arith.constant 0 : index
    %6 = vector.load %arg5[%c0_8, %c0_9] : memref<32x64xf32, #tpu.memory_space<vmem>>, vector<32x64xf32>
    %cst_10 = arith.constant dense<0.000000e+00> : vector<16x64xf32>
    %7 = tpu.matmul %1, %6, %cst_10 {dimension_numbers = #tpu.dot_dimension_numbers<[1], [0], [0], [1], [0, 0, 1, 1], [], []>} : vector<16x32xf32>, vector<32x64xf32>, vector<16x64xf32> -> vector<16x64xf32>
    %8 = vector.shape_cast %3 : vector<16x64xf32> to vector<2x8x64xf32>
    %9 = vector.shape_cast %5 : vector<16x64xf32> to vector<2x8x64xf32>
    %10 = vector.shape_cast %7 : vector<16x64xf32> to vector<2x8x64xf32>
    %11 = vector.extract_strided_slice %8 {offsets = [0, 0, 0], sizes = [2, 8, 16], strides = [1, 1, 1]} : vector<2x8x64xf32> to vector<2x8x16xf32>
    %12 = vector.extract_strided_slice %9 {offsets = [0, 0, 0], sizes = [2, 8, 16], strides = [1, 1, 1]} : vector<2x8x64xf32> to vector<2x8x16xf32>
    %13 = vector.extract_strided_slice %10 {offsets = [0, 0, 0], sizes = [2, 8, 16], strides = [1, 1, 1]} : vector<2x8x64xf32> to vector<2x8x16xf32>
    "tpu.trace_start"() <{level = 10 : i32, message = "bqd,bkd->bqk"}> : () -> ()
    %cst_11 = arith.constant dense<0.000000e+00> : vector<2x8x8xf32>
    %14 = tpu.matmul %11, %12, %cst_11 {dimension_numbers = #tpu.dot_dimension_numbers<[2], [2], [1], [1], [0, 0, 0, 1, 1, 1], [0], [0]>} : vector<2x8x16xf32>, vector<2x8x16xf32>, vector<2x8x8xf32> -> vector<2x8x8xf32>
    "tpu.trace_stop"() : () -> ()
    %cst_12 = arith.constant 2.500000e-01 : f32
    %15 = vector.broadcast %cst_12 : f32 to vector<2x8x8xf32>
    %16 = arith.mulf %14, %15 : vector<2x8x8xf32>
    %cst_13 = arith.constant dense<0xFF800000> : vector<2x8xf32>
    %17 = vector.multi_reduction <maximumf>, %16, %cst_13 [2] : vector<2x8x8xf32> to vector<2x8xf32>
    %18 = vector.shape_cast %17 : vector<2x8xf32> to vector<2x8x1xf32>
    %19 = vector.broadcast %18 : vector<2x8x1xf32> to vector<2x8x8xf32>
    %20 = arith.subf %16, %19 : vector<2x8x8xf32>
    %21 = math.exp %20 : vector<2x8x8xf32>
    %cst_14 = arith.constant dense<0.000000e+00> : vector<2x8xf32>
    %22 = vector.multi_reduction <add>, %21, %cst_14 [2] : vector<2x8x8xf32> to vector<2x8xf32>
    %23 = vector.shape_cast %22 : vector<2x8xf32> to vector<2x8x1xf32>
    %24 = vector.broadcast %23 : vector<2x8x1xf32> to vector<2x8x8xf32>
    %25 = arith.divf %21, %24 : vector<2x8x8xf32>
    "tpu.trace_start"() <{level = 10 : i32, message = "bqk,bkd->bqd"}> : () -> ()
    %cst_15 = arith.constant dense<0.000000e+00> : vector<2x8x16xf32>
    %26 = tpu.matmul %25, %13, %cst_15 {dimension_numbers = #tpu.dot_dimension_numbers<[2], [1], [1], [2], [0, 0, 0, 1, 1, 2], [0], [0]>} : vector<2x8x8xf32>, vector<2x8x16xf32>, vector<2x8x16xf32> -> vector<2x8x16xf32>
    "tpu.trace_stop"() : () -> ()
    %27 = vector.extract_strided_slice %8 {offsets = [0, 0, 16], sizes = [2, 8, 16], strides = [1, 1, 1]} : vector<2x8x64xf32> to vector<2x8x16xf32>
    %28 = vector.extract_strided_slice %9 {offsets = [0, 0, 16], sizes = [2, 8, 16], strides = [1, 1, 1]} : vector<2x8x64xf32> to vector<2x8x16xf32>
    %29 = vector.extract_strided_slice %10 {offsets = [0, 0, 16], sizes = [2, 8, 16], strides = [1, 1, 1]} : vector<2x8x64xf32> to vector<2x8x16xf32>
    "tpu.trace_start"() <{level = 10 : i32, message = "bqd,bkd->bqk"}> : () -> ()
    %cst_16 = arith.constant dense<0.000000e+00> : vector<2x8x8xf32>
    %30 = tpu.matmul %27, %28, %cst_16 {dimension_numbers = #tpu.dot_dimension_numbers<[2], [2], [1], [1], [0, 0, 0, 1, 1, 1], [0], [0]>} : vector<2x8x16xf32>, vector<2x8x16xf32>, vector<2x8x8xf32> -> vector<2x8x8xf32>
    "tpu.trace_stop"() : () -> ()
    %cst_17 = arith.constant 2.500000e-01 : f32
    %31 = vector.broadcast %cst_17 : f32 to vector<2x8x8xf32>
    %32 = arith.mulf %30, %31 : vector<2x8x8xf32>
    %cst_18 = arith.constant dense<0xFF800000> : vector<2x8xf32>
    %33 = vector.multi_reduction <maximumf>, %32, %cst_18 [2] : vector<2x8x8xf32> to vector<2x8xf32>
    %34 = vector.shape_cast %33 : vector<2x8xf32> to vector<2x8x1xf32>
    %35 = vector.broadcast %34 : vector<2x8x1xf32> to vector<2x8x8xf32>
    %36 = arith.subf %32, %35 : vector<2x8x8xf32>
    %37 = math.exp %36 : vector<2x8x8xf32>
    %cst_19 = arith.constant dense<0.000000e+00> : vector<2x8xf32>
    %38 = vector.multi_reduction <add>, %37, %cst_19 [2] : vector<2x8x8xf32> to vector<2x8xf32>
    %39 = vector.shape_cast %38 : vector<2x8xf32> to vector<2x8x1xf32>
    %40 = vector.broadcast %39 : vector<2x8x1xf32> to vector<2x8x8xf32>
    %41 = arith.divf %37, %40 : vector<2x8x8xf32>
    "tpu.trace_start"() <{level = 10 : i32, message = "bqk,bkd->bqd"}> : () -> ()
    %cst_20 = arith.constant dense<0.000000e+00> : vector<2x8x16xf32>
    %42 = tpu.matmul %41, %29, %cst_20 {dimension_numbers = #tpu.dot_dimension_numbers<[2], [1], [1], [2], [0, 0, 0, 1, 1, 2], [0], [0]>} : vector<2x8x8xf32>, vector<2x8x16xf32>, vector<2x8x16xf32> -> vector<2x8x16xf32>
    "tpu.trace_stop"() : () -> ()
    %43 = vector.extract_strided_slice %8 {offsets = [0, 0, 32], sizes = [2, 8, 16], strides = [1, 1, 1]} : vector<2x8x64xf32> to vector<2x8x16xf32>
    %44 = vector.extract_strided_slice %9 {offsets = [0, 0, 32], sizes = [2, 8, 16], strides = [1, 1, 1]} : vector<2x8x64xf32> to vector<2x8x16xf32>
    %45 = vector.extract_strided_slice %10 {offsets = [0, 0, 32], sizes = [2, 8, 16], strides = [1, 1, 1]} : vector<2x8x64xf32> to vector<2x8x16xf32>
    "tpu.trace_start"() <{level = 10 : i32, message = "bqd,bkd->bqk"}> : () -> ()
    %cst_21 = arith.constant dense<0.000000e+00> : vector<2x8x8xf32>
    %46 = tpu.matmul %43, %44, %cst_21 {dimension_numbers = #tpu.dot_dimension_numbers<[2], [2], [1], [1], [0, 0, 0, 1, 1, 1], [0], [0]>} : vector<2x8x16xf32>, vector<2x8x16xf32>, vector<2x8x8xf32> -> vector<2x8x8xf32>
    "tpu.trace_stop"() : () -> ()
    %cst_22 = arith.constant 2.500000e-01 : f32
    %47 = vector.broadcast %cst_22 : f32 to vector<2x8x8xf32>
    %48 = arith.mulf %46, %47 : vector<2x8x8xf32>
    %cst_23 = arith.constant dense<0xFF800000> : vector<2x8xf32>
    %49 = vector.multi_reduction <maximumf>, %48, %cst_23 [2] : vector<2x8x8xf32> to vector<2x8xf32>
    %50 = vector.shape_cast %49 : vector<2x8xf32> to vector<2x8x1xf32>
    %51 = vector.broadcast %50 : vector<2x8x1xf32> to vector<2x8x8xf32>
    %52 = arith.subf %48, %51 : vector<2x8x8xf32>
    %53 = math.exp %52 : vector<2x8x8xf32>
    %cst_24 = arith.constant dense<0.000000e+00> : vector<2x8xf32>
    %54 = vector.multi_reduction <add>, %53, %cst_24 [2] : vector<2x8x8xf32> to vector<2x8xf32>
    %55 = vector.shape_cast %54 : vector<2x8xf32> to vector<2x8x1xf32>
    %56 = vector.broadcast %55 : vector<2x8x1xf32> to vector<2x8x8xf32>
    %57 = arith.divf %53, %56 : vector<2x8x8xf32>
    "tpu.trace_start"() <{level = 10 : i32, message = "bqk,bkd->bqd"}> : () -> ()
    %cst_25 = arith.constant dense<0.000000e+00> : vector<2x8x16xf32>
    %58 = tpu.matmul %57, %45, %cst_25 {dimension_numbers = #tpu.dot_dimension_numbers<[2], [1], [1], [2], [0, 0, 0, 1, 1, 2], [0], [0]>} : vector<2x8x8xf32>, vector<2x8x16xf32>, vector<2x8x16xf32> -> vector<2x8x16xf32>
    "tpu.trace_stop"() : () -> ()
    %59 = vector.extract_strided_slice %8 {offsets = [0, 0, 48], sizes = [2, 8, 16], strides = [1, 1, 1]} : vector<2x8x64xf32> to vector<2x8x16xf32>
    %60 = vector.extract_strided_slice %9 {offsets = [0, 0, 48], sizes = [2, 8, 16], strides = [1, 1, 1]} : vector<2x8x64xf32> to vector<2x8x16xf32>
    %61 = vector.extract_strided_slice %10 {offsets = [0, 0, 48], sizes = [2, 8, 16], strides = [1, 1, 1]} : vector<2x8x64xf32> to vector<2x8x16xf32>
    "tpu.trace_start"() <{level = 10 : i32, message = "bqd,bkd->bqk"}> : () -> ()
    %cst_26 = arith.constant dense<0.000000e+00> : vector<2x8x8xf32>
    %62 = tpu.matmul %59, %60, %cst_26 {dimension_numbers = #tpu.dot_dimension_numbers<[2], [2], [1], [1], [0, 0, 0, 1, 1, 1], [0], [0]>} : vector<2x8x16xf32>, vector<2x8x16xf32>, vector<2x8x8xf32> -> vector<2x8x8xf32>
    "tpu.trace_stop"() : () -> ()
    %cst_27 = arith.constant 2.500000e-01 : f32
    %63 = vector.broadcast %cst_27 : f32 to vector<2x8x8xf32>
    %64 = arith.mulf %62, %63 : vector<2x8x8xf32>
    %cst_28 = arith.constant dense<0xFF800000> : vector<2x8xf32>
    %65 = vector.multi_reduction <maximumf>, %64, %cst_28 [2] : vector<2x8x8xf32> to vector<2x8xf32>
    %66 = vector.shape_cast %65 : vector<2x8xf32> to vector<2x8x1xf32>
    %67 = vector.broadcast %66 : vector<2x8x1xf32> to vector<2x8x8xf32>
    %68 = arith.subf %64, %67 : vector<2x8x8xf32>
    %69 = math.exp %68 : vector<2x8x8xf32>
    %cst_29 = arith.constant dense<0.000000e+00> : vector<2x8xf32>
    %70 = vector.multi_reduction <add>, %69, %cst_29 [2] : vector<2x8x8xf32> to vector<2x8xf32>
    %71 = vector.shape_cast %70 : vector<2x8xf32> to vector<2x8x1xf32>
    %72 = vector.broadcast %71 : vector<2x8x1xf32> to vector<2x8x8xf32>
    %73 = arith.divf %69, %72 : vector<2x8x8xf32>
    "tpu.trace_start"() <{level = 10 : i32, message = "bqk,bkd->bqd"}> : () -> ()
    %cst_30 = arith.constant dense<0.000000e+00> : vector<2x8x16xf32>
    %74 = tpu.matmul %73, %61, %cst_30 {dimension_numbers = #tpu.dot_dimension_numbers<[2], [1], [1], [2], [0, 0, 0, 1, 1, 2], [0], [0]>} : vector<2x8x8xf32>, vector<2x8x16xf32>, vector<2x8x16xf32> -> vector<2x8x16xf32>
    "tpu.trace_stop"() : () -> ()
    %75 = tpu.concatenate %26, %42, %58, %74 in 2 : vector<2x8x16xf32>, vector<2x8x16xf32>, vector<2x8x16xf32>, vector<2x8x16xf32> -> vector<2x8x64xf32>
    %76 = vector.shape_cast %75 : vector<2x8x64xf32> to vector<16x64xf32>
    %c0_31 = arith.constant 0 : index
    %c0_32 = arith.constant 0 : index
    %77 = vector.load %arg6[%c0_31, %c0_32] : memref<64x32xf32, #tpu.memory_space<vmem>>, vector<64x32xf32>
    %cst_33 = arith.constant dense<0.000000e+00> : vector<16x32xf32>
    %78 = tpu.matmul %76, %77, %cst_33 {dimension_numbers = #tpu.dot_dimension_numbers<[1], [0], [0], [1], [0, 0, 1, 1], [], []>} : vector<16x64xf32>, vector<64x32xf32>, vector<16x32xf32> -> vector<16x32xf32>
    %c0_34 = arith.constant 0 : index
    %c0_35 = arith.constant 0 : index
    %79 = vector.load %arg7[%c0_34, %c0_35] : memref<1x32xf32, #tpu.memory_space<vmem>>, vector<1x32xf32>
    %80 = vector.broadcast %79 : vector<1x32xf32> to vector<16x32xf32>
    %81 = arith.addf %78, %80 : vector<16x32xf32>
    %c0_36 = arith.constant 0 : index
    %c0_37 = arith.constant 0 : index
    %82 = vector.load %arg8[%c0_36, %c0_37] : memref<16x32xf32, #tpu.memory_space<vmem>>, vector<16x32xf32>
    tpu.vector_store %arg8[%c0_36, %c0_37], %81 {strides = array<i32>} : memref<16x32xf32, #tpu.memory_space<vmem>>, vector<16x32xf32>,
    return
  }
  func.func @transform_0(%arg0: i32) -> (i32, i32) {
    %c0_i32 = arith.constant 0 : i32
    %c0_i32_0 = arith.constant 0 : i32
    return %arg0, %c0_i32 : i32, i32
  }
  func.func @transform_1(%arg0: i32) -> (i32, i32) {
    %c0_i32 = arith.constant 0 : i32
    %c0_i32_0 = arith.constant 0 : i32
    return %arg0, %c0_i32 : i32, i32
  }
  func.func @transform_2(%arg0: i32) -> (i32, i32) {
    %c0_i32 = arith.constant 0 : i32
    %c0_i32_0 = arith.constant 0 : i32
    %c0_i32_1 = arith.constant 0 : i32
    return %c0_i32, %c0_i32_0 : i32, i32
  }
  func.func @transform_3(%arg0: i32) -> (i32, i32) {
    %c0_i32 = arith.constant 0 : i32
    %c0_i32_0 = arith.constant 0 : i32
    %c0_i32_1 = arith.constant 0 : i32
    return %c0_i32, %c0_i32_0 : i32, i32
  }
  func.func @transform_4(%arg0: i32) -> (i32, i32) {
    %c0_i32 = arith.constant 0 : i32
    %c0_i32_0 = arith.constant 0 : i32
    %c0_i32_1 = arith.constant 0 : i32
    return %c0_i32, %c0_i32_0 : i32, i32
  }
  func.func @transform_5(%arg0: i32) -> (i32, i32) {
    %c0_i32 = arith.constant 0 : i32
    %c0_i32_0 = arith.constant 0 : i32
    %c0_i32_1 = arith.constant 0 : i32
    return %c0_i32, %c0_i32_0 : i32, i32
  }
  func.func @transform_6(%arg0: i32) -> (i32, i32) {
    %c0_i32 = arith.constant 0 : i32
    %c0_i32_0 = arith.constant 0 : i32
    %c0_i32_1 = arith.constant 0 : i32
    return %c0_i32, %c0_i32_0 : i32, i32
  }
  func.func @transform_7(%arg0: i32) -> (i32, i32) {
    %c0_i32 = arith.constant 0 : i32
    %c0_i32_0 = arith.constant 0 : i32
    return %arg0, %c0_i32 : i32, i32
  }
}

</mosaic_0001>

<llo_original>
// kernel: tpu_custom_call.1
$region0: #{tpu_custom_call.1}
  #allocation0 [shape = 'u32[]', space=smem, size = 0x4, offset = 0x4, fixed_abs, tag = 'smem constant byte address 0x4 - core index']
  #allocation1 [shape = 'u32[144,128]{1,0:T(1,128)}', space=vmem, size = 0x12000, scoped, tag = 'internal scratch']
  %s0 = inlined_call_operand.hbm [shape: f32[16,32], index: 0, kind: input, shape index: {}]
  %s1 = inlined_call_operand.hbm [shape: f32[16,32], index: 1, kind: input, shape index: {}]
  %s2 = inlined_call_operand.vmem [shape: f32[32,64], index: 2, kind: input, shape index: {}]
  %s3 = inlined_call_operand.vmem [shape: f32[32,64], index: 3, kind: input, shape index: {}]
  %s4 = inlined_call_operand.vmem [shape: f32[32,64], index: 4, kind: input, shape index: {}]
  %s5 = inlined_call_operand.vmem [shape: f32[64,32], index: 5, kind: input, shape index: {}]
  %s6 = inlined_call_operand.vmem [shape: f32[1,32], index: 6, kind: input, shape index: {}]
  %s7 = inlined_call_operand.hbm [shape: f32[16,32], index: 7, kind: output, shape index: {}]
  %s8 = sld [smem:[#allocation0]]
  $region46: #{tpu_custom_call.1} parent=0
    _
  %s10 = ssub.s32 1, %s8
  %s11 = scalar_select 0, %s10, %s8
  $region1: #{tpu_custom_call.1} parent=0
    #allocation2 [shape = 'u8[8192]{0}', space=vmem, size = 0x2000, scoped, tag = 'input window, operand 0, single buffered']
    #allocation3 [shape = 's32[1]{0}', space=sflag, size = 0x4, scoped, tag = 'scoped memory for tpu_custom_call.1']
    #allocation4 [shape = 's32[1]{0}', space=sflag, size = 0x4, scoped, tag = 'scoped memory for tpu_custom_call.1']
    #allocation5 [shape = 'u8[8192]{0}', space=vmem, size = 0x2000, scoped, tag = 'input window, operand 1, single buffered']
    #allocation6 [shape = 's32[1]{0}', space=sflag, size = 0x4, scoped, tag = 'scoped memory for tpu_custom_call.1']
    #allocation7 [shape = 'u8[8192]{0}', space=vmem, size = 0x2000, scoped, tag = 'output window, operand 0, single buffered']
    %12 = vsyncpa [#allocation3], 0
    %13 = vsyncpa [#allocation6], 0
    %14 = vsyncpa [#allocation4], 0
    // Predicated region
    $region2: #{tpu_custom_call.1} parent=1 // pred_check
      _
    $region3: #{tpu_custom_call.1} parent=1 // pred_check_branch
      %16 = sbr.rel (0) target = $region5
    $region4: #{tpu_custom_call.1} parent=1 // pred_region
      %s18 = ssub.s32 256, 256
      %19 = vsyncadd [#allocation3], %s18
      %s20 = sshll.u32 [#allocation2], 4
      %s21 = int_to_ptr.vmem [resolvable:$true] %s20
      %26 = dma.hbm_to_vmem [thread:$0]  %s0, 256, %s21, [#allocation3], 128, 128, 8
    $region5: #{tpu_custom_call.1} parent=1 // pred_fallthru
      _
    // Predicated region
    $region6: #{tpu_custom_call.1} parent=1 // pred_check
      _
    $region7: #{tpu_custom_call.1} parent=1 // pred_check_branch
      %28 = sbr.rel (0) target = $region9
    $region8: #{tpu_custom_call.1} parent=1 // pred_region
      %s30 = ssub.s32 256, 256
      %31 = vsyncadd [#allocation6], %s30
      %s32 = sshll.u32 [#allocation5], 4
      %s33 = int_to_ptr.vmem [resolvable:$true] %s32
      %38 = dma.hbm_to_vmem [thread:$0]  %s1, 256, %s33, [#allocation6], 128, 128, 8
    $region9: #{tpu_custom_call.1} parent=1 // pred_fallthru
      _
    // Predicated region
    $region10: #{tpu_custom_call.1} parent=1 // pred_check
      _
    $region11: #{tpu_custom_call.1} parent=1 // pred_check_branch
      %40 = sbr.rel (0) target = $region13
    $region12: #{tpu_custom_call.1} parent=1 // pred_region
      _
    $region13: #{tpu_custom_call.1} parent=1 // pred_fallthru
      _
    // Predicated region
    $region14: #{tpu_custom_call.1} parent=1 // pred_check
      _
    $region15: #{tpu_custom_call.1} parent=1 // pred_check_branch
      %42 = sbr.rel (0) target = $region17
    $region16: #{tpu_custom_call.1} parent=1 // pred_region
      _
    $region17: #{tpu_custom_call.1} parent=1 // pred_fallthru
      _
    // Predicated region
    $region18: #{tpu_custom_call.1} parent=1 // pred_check
      _
    $region19: #{tpu_custom_call.1} parent=1 // pred_check_branch
      %44 = sbr.rel (0) target = $region21
    $region20: #{tpu_custom_call.1} parent=1 // pred_region
      _
    $region21: #{tpu_custom_call.1} parent=1 // pred_fallthru
      _
    // Predicated region
    $region22: #{tpu_custom_call.1} parent=1 // pred_check
      _
    $region23: #{tpu_custom_call.1} parent=1 // pred_check_branch
      %46 = sbr.rel (0) target = $region25
    $region24: #{tpu_custom_call.1} parent=1 // pred_region
      _
    $region25: #{tpu_custom_call.1} parent=1 // pred_fallthru
      _
    // Predicated region
    $region26: #{tpu_custom_call.1} parent=1 // pred_check
      _
    $region27: #{tpu_custom_call.1} parent=1 // pred_check_branch
      %48 = sbr.rel (0) target = $region29
    $region28: #{tpu_custom_call.1} parent=1 // pred_region
      _
    $region29: #{tpu_custom_call.1} parent=1 // pred_fallthru
      _
    // Predicated region
    $region30: #{tpu_custom_call.1} parent=1 // pred_check
      _
    $region31: #{tpu_custom_call.1} parent=1 // pred_check_branch
      %50 = sbr.rel (0) target = $region33
    $region32: #{tpu_custom_call.1} parent=1 // pred_region
      %51 = dma.done [#allocation3], 256
    $region33: #{tpu_custom_call.1} parent=1 // pred_fallthru
      _
    // Predicated region
    $region34: #{tpu_custom_call.1} parent=1 // pred_check
      _
    $region35: #{tpu_custom_call.1} parent=1 // pred_check_branch
      %53 = sbr.rel (0) target = $region37
    $region36: #{tpu_custom_call.1} parent=1 // pred_region
      %54 = dma.done [#allocation6], 256
    $region37: #{tpu_custom_call.1} parent=1 // pred_fallthru
      _
    %v55 = vld [vmem:[#allocation2] sm:$0xff]
    %v56 = vld [vmem:[#allocation2 + $0x8] sm:$0xff]
    %v57 = vld [vmem:[#allocation5] sm:$0xff]
    %v58 = vld [vmem:[#allocation5 + $0x8] sm:$0xff]
    %v59 = vld [vmem:[%s2] sm:$0xff]
    %v60 = vld [vmem:[%s2 + $0x8] sm:$0xff]
    %v61 = vld [vmem:[%s2 + $0x10] sm:$0xff]
    %v62 = vld [vmem:[%s2 + $0x18] sm:$0xff]
    %vm63 = vcmask 261120
    %v65 = vsel %vm63, %v55, 0
    %v68 = vsel %vm63, %v56, 0
    %70 = vmatprep.subr.mxu0 0.0
    %71 = vmatpush1.msra.mxu0 %v59
    %72 = vmatprep.subr.mxu0 0.0
    %73 = vmatpush1.msra.mxu0 %v60
    %74 = vmatprep.subr.mxu0 0.0
    %75 = vmatpush1.msra.mxu0 %v61
    %76 = vmatprep.subr.mxu0 0.0
    %77 = vmatpush1.msra.mxu0 %v62
    %78 = vmatprep.subr.mxu0 0.0
    %79 = vmatpush1.msra.mxu0 0.0
    %80 = vmatprep.subr.mxu0 0.0
    %81 = vmatpush1.msra.mxu0 0.0
    %82 = vmatprep.subr.mxu0 0.0
    %83 = vmatpush1.msra.mxu0 0.0
    %84 = vmatprep.subr.mxu0 0.0
    %85 = vmatpush1.msra.mxu0 0.0
    %86 = vmatprep.subr.mxu0 0.0
    %87 = vmatpush1.msra.mxu0 0.0
    %88 = vmatprep.subr.mxu0 0.0
    %89 = vmatpush1.msra.mxu0 0.0
    %90 = vmatprep.subr.mxu0 0.0
    %91 = vmatpush1.msra.mxu0 0.0
    %92 = vmatprep.subr.mxu0 0.0
    %93 = vmatpush1.msra.mxu0 0.0
    %94 = vmatprep.subr.mxu0 0.0
    %95 = vmatpush1.msra.mxu0 0.0
    %96 = vmatprep.subr.mxu0 0.0
    %97 = vmatpush1.msra.mxu0 0.0
    %98 = vmatprep.subr.mxu0 0.0
    %99 = vmatpush1.msra.mxu0 0.0
    %100 = vmatprep.subr.mxu0 0.0
    %101 = vmatpush1.msra.mxu0 0.0
    %102 = vmatprep.subr.mxu0 0.0
    %103 = vmatpush1.msra.mxu0 0.0
    %104 = vmatprep.subr.mxu0 0.0
    %105 = vmatpush1.msra.mxu0 0.0
    %106 = vmatprep.subr.mxu0 0.0
    %107 = vmatpush1.msra.mxu0 0.0
    %108 = vmatprep.subr.mxu0 0.0
    %109 = vmatpush1.msra.mxu0 0.0
    %110 = vmatprep.subr.mxu0 0.0
    %111 = vmatpush1.msra.mxu0 0.0
    %112 = vmatprep.subr.mxu0 0.0
    %113 = vmatpush1.msra.mxu0 0.0
    %114 = vmatprep.subr.mxu0 0.0
    %115 = vmatpush1.msra.mxu0 0.0
    %116 = vmatprep.subr.mxu0 0.0
    %117 = vmatpush1.msra.mxu0 0.0
    %118 = vmatprep.subr.mxu0 0.0
    %119 = vmatpush1.msra.mxu0 0.0
    %120 = vmatprep.subr.mxu0 0.0
    %121 = vmatpush1.msra.mxu0 0.0
    %122 = vmatprep.subr.mxu0 0.0
    %123 = vmatpush1.msra.mxu0 0.0
    %124 = vmatprep.subr.mxu0 0.0
    %125 = vmatpush1.msra.mxu0 0.0
    %126 = vmatprep.subr.mxu0 0.0
    %127 = vmatpush1.msra.mxu0 0.0
    %128 = vmatprep.subr.mxu0 0.0
    %129 = vmatpush1.msra.mxu0 0.0
    %130 = vmatprep.subr.mxu0 0.0
    %131 = vmatpush1.msra.mxu0 0.0
    %132 = vmatprep.subr.mxu0 0.0
    %133 = vmatpush1.msra.mxu0 0.0
    %134 = vmatprep.mubr.f32.mxu0 0.0
    %135 = vmatmul.mubr.f32.gmra.mrb[0].mxu0 %v65
    %v136 = vpop.f32.mrb[0].mxu0
    %v137 = vadd.f32 0.0, %v136
    %v138 = vpop.f32.mrb[0].mxu0
    %139 = vmatprep.mubr.f32.mxu0 0.0
    %140 = vmatmul.mubr.f32.gmra.mrb[0].mxu0 %v68
    %v141 = vpop.f32.mrb[0].mxu0
    %v142 = vadd.f32 0.0, %v141
    %v143 = vpop.f32.mrb[0].mxu0
    %144 = vdwg.mxu0
    %v145 = vld [vmem:[%s3] sm:$0xff]
    %v146 = vld [vmem:[%s3 + $0x8] sm:$0xff]
    %v147 = vld [vmem:[%s3 + $0x10] sm:$0xff]
    %v148 = vld [vmem:[%s3 + $0x18] sm:$0xff]
    %v150 = vsel %vm63, %v57, 0
    %v153 = vsel %vm63, %v58, 0
    %155 = vmatprep.subr.mxu0 0.0
    %156 = vmatpush1.msra.mxu0 %v145
    %157 = vmatprep.subr.mxu0 0.0
    %158 = vmatpush1.msra.mxu0 %v146
    %159 = vmatprep.subr.mxu0 0.0
    %160 = vmatpush1.msra.mxu0 %v147
    %161 = vmatprep.subr.mxu0 0.0
    %162 = vmatpush1.msra.mxu0 %v148
    %163 = vmatprep.subr.mxu0 0.0
    %164 = vmatpush1.msra.mxu0 0.0
    %165 = vmatprep.subr.mxu0 0.0
    %166 = vmatpush1.msra.mxu0 0.0
    %167 = vmatprep.subr.mxu0 0.0
    %168 = vmatpush1.msra.mxu0 0.0
    %169 = vmatprep.subr.mxu0 0.0
    %170 = vmatpush1.msra.mxu0 0.0
    %171 = vmatprep.subr.mxu0 0.0
    %172 = vmatpush1.msra.mxu0 0.0
    %173 = vmatprep.subr.mxu0 0.0
    %174 = vmatpush1.msra.mxu0 0.0
    %175 = vmatprep.subr.mxu0 0.0
    %176 = vmatpush1.msra.mxu0 0.0
    %177 = vmatprep.subr.mxu0 0.0
    %178 = vmatpush1.msra.mxu0 0.0
    %179 = vmatprep.subr.mxu0 0.0
    %180 = vmatpush1.msra.mxu0 0.0
    %181 = vmatprep.subr.mxu0 0.0
    %182 = vmatpush1.msra.mxu0 0.0
    %183 = vmatprep.subr.mxu0 0.0
    %184 = vmatpush1.msra.mxu0 0.0
    %185 = vmatprep.subr.mxu0 0.0
    %186 = vmatpush1.msra.mxu0 0.0
    %187 = vmatprep.subr.mxu0 0.0
    %188 = vmatpush1.msra.mxu0 0.0
    %189 = vmatprep.subr.mxu0 0.0
    %190 = vmatpush1.msra.mxu0 0.0
    %191 = vmatprep.subr.mxu0 0.0
    %192 = vmatpush1.msra.mxu0 0.0
    %193 = vmatprep.subr.mxu0 0.0
    %194 = vmatpush1.msra.mxu0 0.0
    %195 = vmatprep.subr.mxu0 0.0
    %196 = vmatpush1.msra.mxu0 0.0
    %197 = vmatprep.subr.mxu0 0.0
    %198 = vmatpush1.msra.mxu0 0.0
    %199 = vmatprep.subr.mxu0 0.0
    %200 = vmatpush1.msra.mxu0 0.0
    %201 = vmatprep.subr.mxu0 0.0
    %202 = vmatpush1.msra.mxu0 0.0
    %203 = vmatprep.subr.mxu0 0.0
    %204 = vmatpush1.msra.mxu0 0.0
    %205 = vmatprep.subr.mxu0 0.0
    %206 = vmatpush1.msra.mxu0 0.0
    %207 = vmatprep.subr.mxu0 0.0
    %208 = vmatpush1.msra.mxu0 0.0
    %209 = vmatprep.subr.mxu0 0.0
    %210 = vmatpush1.msra.mxu0 0.0
    %211 = vmatprep.subr.mxu0 0.0
    %212 = vmatpush1.msra.mxu0 0.0
    %213 = vmatprep.subr.mxu0 0.0
    %214 = vmatpush1.msra.mxu0 0.0
    %215 = vmatprep.subr.mxu0 0.0
    %216 = vmatpush1.msra.mxu0 0.0
    %217 = vmatprep.subr.mxu0 0.0
    %218 = vmatpush1.msra.mxu0 0.0
    %219 = vmatprep.mubr.f32.mxu0 0.0
    %220 = vmatmul.mubr.f32.gmra.mrb[0].mxu0 %v150
    %v221 = vpop.f32.mrb[0].mxu0
    %v222 = vadd.f32 0.0, %v221
    %v223 = vpop.f32.mrb[0].mxu0
    %224 = vmatprep.mubr.f32.mxu0 0.0
    %225 = vmatmul.mubr.f32.gmra.mrb[0].mxu0 %v153
    %v226 = vpop.f32.mrb[0].mxu0
    %v227 = vadd.f32 0.0, %v226
    %v228 = vpop.f32.mrb[0].mxu0
    %229 = vdwg.mxu0
    %v230 = vld [vmem:[%s4] sm:$0xff]
    %v231 = vld [vmem:[%s4 + $0x8] sm:$0xff]
    %v232 = vld [vmem:[%s4 + $0x10] sm:$0xff]
    %v233 = vld [vmem:[%s4 + $0x18] sm:$0xff]
    %234 = vmatprep.subr.mxu0 0.0
    %235 = vmatpush1.msra.mxu0 %v230
    %236 = vmatprep.subr.mxu0 0.0
    %237 = vmatpush1.msra.mxu0 %v231
    %238 = vmatprep.subr.mxu0 0.0
    %239 = vmatpush1.msra.mxu0 %v232
    %240 = vmatprep.subr.mxu0 0.0
    %241 = vmatpush1.msra.mxu0 %v233
    %242 = vmatprep.subr.mxu0 0.0
    %243 = vmatpush1.msra.mxu0 0.0
    %244 = vmatprep.subr.mxu0 0.0
    %245 = vmatpush1.msra.mxu0 0.0
    %246 = vmatprep.subr.mxu0 0.0
    %247 = vmatpush1.msra.mxu0 0.0
    %248 = vmatprep.subr.mxu0 0.0
    %249 = vmatpush1.msra.mxu0 0.0
    %250 = vmatprep.subr.mxu0 0.0
    %251 = vmatpush1.msra.mxu0 0.0
    %252 = vmatprep.subr.mxu0 0.0
    %253 = vmatpush1.msra.mxu0 0.0
    %254 = vmatprep.subr.mxu0 0.0
    %255 = vmatpush1.msra.mxu0 0.0
    %256 = vmatprep.subr.mxu0 0.0
    %257 = vmatpush1.msra.mxu0 0.0
    %258 = vmatprep.subr.mxu0 0.0
    %259 = vmatpush1.msra.mxu0 0.0
    %260 = vmatprep.subr.mxu0 0.0
    %261 = vmatpush1.msra.mxu0 0.0
    %262 = vmatprep.subr.mxu0 0.0
    %263 = vmatpush1.msra.mxu0 0.0
    %264 = vmatprep.subr.mxu0 0.0
    %265 = vmatpush1.msra.mxu0 0.0
    %266 = vmatprep.subr.mxu0 0.0
    %267 = vmatpush1.msra.mxu0 0.0
    %268 = vmatprep.subr.mxu0 0.0
    %269 = vmatpush1.msra.mxu0 0.0
    %270 = vmatprep.subr.mxu0 0.0
    %271 = vmatpush1.msra.mxu0 0.0
    %272 = vmatprep.subr.mxu0 0.0
    %273 = vmatpush1.msra.mxu0 0.0
    %274 = vmatprep.subr.mxu0 0.0
    %275 = vmatpush1.msra.mxu0 0.0
    %276 = vmatprep.subr.mxu0 0.0
    %277 = vmatpush1.msra.mxu0 0.0
    %278 = vmatprep.subr.mxu0 0.0
    %279 = vmatpush1.msra.mxu0 0.0
    %280 = vmatprep.subr.mxu0 0.0
    %281 = vmatpush1.msra.mxu0 0.0
    %282 = vmatprep.subr.mxu0 0.0
    %283 = vmatpush1.msra.mxu0 0.0
    %284 = vmatprep.subr.mxu0 0.0
    %285 = vmatpush1.msra.mxu0 0.0
    %286 = vmatprep.subr.mxu0 0.0
    %287 = vmatpush1.msra.mxu0 0.0
    %288 = vmatprep.subr.mxu0 0.0
    %289 = vmatpush1.msra.mxu0 0.0
    %290 = vmatprep.subr.mxu0 0.0
    %291 = vmatpush1.msra.mxu0 0.0
    %292 = vmatprep.subr.mxu0 0.0
    %293 = vmatpush1.msra.mxu0 0.0
    %294 = vmatprep.subr.mxu0 0.0
    %295 = vmatpush1.msra.mxu0 0.0
    %296 = vmatprep.subr.mxu0 0.0
    %297 = vmatpush1.msra.mxu0 0.0
    %298 = vmatprep.mubr.f32.mxu0 0.0
    %299 = vmatmul.mubr.f32.gmra.mrb[0].mxu0 %v150
    %v300 = vpop.f32.mrb[0].mxu0
    %v301 = vadd.f32 0.0, %v300
    %v302 = vpop.f32.mrb[0].mxu0
    %303 = vmatprep.mubr.f32.mxu0 0.0
    %304 = vmatmul.mubr.f32.gmra.mrb[0].mxu0 %v153
    %v305 = vpop.f32.mrb[0].mxu0
    %v306 = vadd.f32 0.0, %v305
    %v307 = vpop.f32.mrb[0].mxu0
    %308 = vdwg.mxu0
    %vm309 = vcmask 130048
    %v311 = vsel %vm309, %v137, 0
    %v314 = vsel %vm309, %v222, 0
    %316 = vmatprep.subr.mxu0 0.0
    %317 = vmatpush1.xpose.msra.mxu0 %v314
    %318 = vmatprep.subr.mxu0 0.0
    %319 = vmatpush1.xpose.msra.mxu0 0.0
    %320 = vmatprep.subr.mxu0 0.0
    %321 = vmatpush1.xpose.msra.mxu0 0.0
    %322 = vmatprep.subr.mxu0 0.0
    %323 = vmatpush1.xpose.msra.mxu0 0.0
    %324 = vmatprep.subr.mxu0 0.0
    %325 = vmatpush1.xpose.msra.mxu0 0.0
    %326 = vmatprep.subr.mxu0 0.0
    %327 = vmatpush1.xpose.msra.mxu0 0.0
    %328 = vmatprep.subr.mxu0 0.0
    %329 = vmatpush1.xpose.msra.mxu0 0.0
    %330 = vmatprep.subr.mxu0 0.0
    %331 = vmatpush1.xpose.msra.mxu0 0.0
    %332 = vmatprep.subr.mxu0 0.0
    %333 = vmatpush1.xpose.msra.mxu0 0.0
    %334 = vmatprep.subr.mxu0 0.0
    %335 = vmatpush1.xpose.msra.mxu0 0.0
    %336 = vmatprep.subr.mxu0 0.0
    %337 = vmatpush1.xpose.msra.mxu0 0.0
    %338 = vmatprep.subr.mxu0 0.0
    %339 = vmatpush1.xpose.msra.mxu0 0.0
    %340 = vmatprep.subr.mxu0 0.0
    %341 = vmatpush1.xpose.msra.mxu0 0.0
    %342 = vmatprep.subr.mxu0 0.0
    %343 = vmatpush1.xpose.msra.mxu0 0.0
    %344 = vmatprep.subr.mxu0 0.0
    %345 = vmatpush1.xpose.msra.mxu0 0.0
    %346 = vmatprep.subr.mxu0 0.0
    %347 = vmatpush1.xpose.msra.mxu0 0.0
    %348 = vmatprep.subr.mxu0 0.0
    %349 = vmatpush1.xpose.msra.mxu0 0.0
    %350 = vmatprep.subr.mxu0 0.0
    %351 = vmatpush1.xpose.msra.mxu0 0.0
    %352 = vmatprep.subr.mxu0 0.0
    %353 = vmatpush1.xpose.msra.mxu0 0.0
    %354 = vmatprep.subr.mxu0 0.0
    %355 = vmatpush1.xpose.msra.mxu0 0.0
    %356 = vmatprep.subr.mxu0 0.0
    %357 = vmatpush1.xpose.msra.mxu0 0.0
    %358 = vmatprep.subr.mxu0 0.0
    %359 = vmatpush1.xpose.msra.mxu0 0.0
    %360 = vmatprep.subr.mxu0 0.0
    %361 = vmatpush1.xpose.msra.mxu0 0.0
    %362 = vmatprep.subr.mxu0 0.0
    %363 = vmatpush1.xpose.msra.mxu0 0.0
    %364 = vmatprep.subr.mxu0 0.0
    %365 = vmatpush1.xpose.msra.mxu0 0.0
    %366 = vmatprep.subr.mxu0 0.0
    %367 = vmatpush1.xpose.msra.mxu0 0.0
    %368 = vmatprep.subr.mxu0 0.0
    %369 = vmatpush1.xpose.msra.mxu0 0.0
    %370 = vmatprep.subr.mxu0 0.0
    %371 = vmatpush1.xpose.msra.mxu0 0.0
    %372 = vmatprep.subr.mxu0 0.0
    %373 = vmatpush1.xpose.msra.mxu0 0.0
    %374 = vmatprep.subr.mxu0 0.0
    %375 = vmatpush1.xpose.msra.mxu0 0.0
    %376 = vmatprep.subr.mxu0 0.0
    %377 = vmatpush1.xpose.msra.mxu0 0.0
    %378 = vmatprep.subr.mxu0 0.0
    %379 = vmatpush1.xpose.msra.mxu0 0.0
    %380 = vmatprep.mubr.f32.mxu0 0.0
    %381 = vmatmul.mubr.f32.gmra.mrb[0].mxu0 %v311
    %v382 = vpop.f32.mrb[0].mxu0
    %v383 = vadd.f32 0.0, %v382
    %v384 = vpop.f32.mrb[0].mxu0
    %385 = vdwg.mxu0
    %v387 = vsel %vm309, %v142, 0
    %v390 = vsel %vm309, %v227, 0
    %392 = vmatprep.subr.mxu0 0.0
    %393 = vmatpush1.xpose.msra.mxu0 %v390
    %394 = vmatprep.subr.mxu0 0.0
    %395 = vmatpush1.xpose.msra.mxu0 0.0
    %396 = vmatprep.subr.mxu0 0.0
    %397 = vmatpush1.xpose.msra.mxu0 0.0
    %398 = vmatprep.subr.mxu0 0.0
    %399 = vmatpush1.xpose.msra.mxu0 0.0
    %400 = vmatprep.subr.mxu0 0.0
    %401 = vmatpush1.xpose.msra.mxu0 0.0
    %402 = vmatprep.subr.mxu0 0.0
    %403 = vmatpush1.xpose.msra.mxu0 0.0
    %404 = vmatprep.subr.mxu0 0.0
    %405 = vmatpush1.xpose.msra.mxu0 0.0
    %406 = vmatprep.subr.mxu0 0.0
    %407 = vmatpush1.xpose.msra.mxu0 0.0
    %408 = vmatprep.subr.mxu0 0.0
    %409 = vmatpush1.xpose.msra.mxu0 0.0
    %410 = vmatprep.subr.mxu0 0.0
    %411 = vmatpush1.xpose.msra.mxu0 0.0
    %412 = vmatprep.subr.mxu0 0.0
    %413 = vmatpush1.xpose.msra.mxu0 0.0
    %414 = vmatprep.subr.mxu0 0.0
    %415 = vmatpush1.xpose.msra.mxu0 0.0
    %416 = vmatprep.subr.mxu0 0.0
    %417 = vmatpush1.xpose.msra.mxu0 0.0
    %418 = vmatprep.subr.mxu0 0.0
    %419 = vmatpush1.xpose.msra.mxu0 0.0
    %420 = vmatprep.subr.mxu0 0.0
    %421 = vmatpush1.xpose.msra.mxu0 0.0
    %422 = vmatprep.subr.mxu0 0.0
    %423 = vmatpush1.xpose.msra.mxu0 0.0
    %424 = vmatprep.subr.mxu0 0.0
    %425 = vmatpush1.xpose.msra.mxu0 0.0
    %426 = vmatprep.subr.mxu0 0.0
    %427 = vmatpush1.xpose.msra.mxu0 0.0
    %428 = vmatprep.subr.mxu0 0.0
    %429 = vmatpush1.xpose.msra.mxu0 0.0
    %430 = vmatprep.subr.mxu0 0.0
    %431 = vmatpush1.xpose.msra.mxu0 0.0
    %432 = vmatprep.subr.mxu0 0.0
    %433 = vmatpush1.xpose.msra.mxu0 0.0
    %434 = vmatprep.subr.mxu0 0.0
    %435 = vmatpush1.xpose.msra.mxu0 0.0
    %436 = vmatprep.subr.mxu0 0.0
    %437 = vmatpush1.xpose.msra.mxu0 0.0
    %438 = vmatprep.subr.mxu0 0.0
    %439 = vmatpush1.xpose.msra.mxu0 0.0
    %440 = vmatprep.subr.mxu0 0.0
    %441 = vmatpush1.xpose.msra.mxu0 0.0
    %442 = vmatprep.subr.mxu0 0.0
    %443 = vmatpush1.xpose.msra.mxu0 0.0
    %444 = vmatprep.subr.mxu0 0.0
    %445 = vmatpush1.xpose.msra.mxu0 0.0
    %446 = vmatprep.subr.mxu0 0.0
    %447 = vmatpush1.xpose.msra.mxu0 0.0
    %448 = vmatprep.subr.mxu0 0.0
    %449 = vmatpush1.xpose.msra.mxu0 0.0
    %450 = vmatprep.subr.mxu0 0.0
    %451 = vmatpush1.xpose.msra.mxu0 0.0
    %452 = vmatprep.subr.mxu0 0.0
    %453 = vmatpush1.xpose.msra.mxu0 0.0
    %454 = vmatprep.subr.mxu0 0.0
    %455 = vmatpush1.xpose.msra.mxu0 0.0
    %456 = vmatprep.mubr.f32.mxu0 0.0
    %457 = vmatmul.mubr.f32.gmra.mrb[0].mxu0 %v387
    %v458 = vpop.f32.mrb[0].mxu0
    %v459 = vadd.f32 0.0, %v458
    %v460 = vpop.f32.mrb[0].mxu0
    %461 = vdwg.mxu0
    %v462 = vmul.f32 %v383, 0.25
    %v463 = vmul.f32 %v459, 0.25
    %vm464 = vcmask 64512
    %v465 = vsel %vm464, %v462, -inf
    %466 = vmax.xlane.f32.xlu0 %v465
    %v467 = vpop.xlane.xlu0 %466
    %v468 = vsel %vm464, %v463, -inf
    %469 = vmax.xlane.f32.xlu0 %v468
    %v470 = vpop.xlane.xlu0 %469
    %v471 = vsub.f32 %v462, %v467
    %v472 = vsub.f32 %v463, %v470
    %v473 = vmul.f32 %v471, 1.442695
    %v474 = vpow.pop %v473
    %v475 = vmul.f32 %v472, 1.442695
    %v476 = vpow.pop %v475
    %v477 = vsel %vm464, %v474, 0.0
    %478 = vadd.xlane.f32.xlu0 %v477
    %v479 = vpop.xlane.xlu0 %478
    %v480 = vsel %vm464, %v476, 0.0
    %481 = vadd.xlane.f32.xlu0 %v480
    %v482 = vpop.xlane.xlu0 %481
    %v483 = vrcp.pop %v479
    %v484 = vmul.f32 %v474, %v483
    %v485 = vrcp.pop %v482
    %v486 = vmul.f32 %v476, %v485
    %v488 = vsel %vm464, %v484, 0
    %490 = vmatprep.subr.mxu0 0.0
    %491 = vmatpush1.msra.mxu0 %v301
    %492 = vmatprep.subr.mxu0 0.0
    %493 = vmatpush1.msra.mxu0 0.0
    %494 = vmatprep.subr.mxu0 0.0
    %495 = vmatpush1.msra.mxu0 0.0
    %496 = vmatprep.subr.mxu0 0.0
    %497 = vmatpush1.msra.mxu0 0.0
    %498 = vmatprep.subr.mxu0 0.0
    %499 = vmatpush1.msra.mxu0 0.0
    %500 = vmatprep.subr.mxu0 0.0
    %501 = vmatpush1.msra.mxu0 0.0
    %502 = vmatprep.subr.mxu0 0.0
    %503 = vmatpush1.msra.mxu0 0.0
    %504 = vmatprep.subr.mxu0 0.0
    %505 = vmatpush1.msra.mxu0 0.0
    %506 = vmatprep.subr.mxu0 0.0
    %507 = vmatpush1.msra.mxu0 0.0
    %508 = vmatprep.subr.mxu0 0.0
    %509 = vmatpush1.msra.mxu0 0.0
    %510 = vmatprep.subr.mxu0 0.0
    %511 = vmatpush1.msra.mxu0 0.0
    %512 = vmatprep.subr.mxu0 0.0
    %513 = vmatpush1.msra.mxu0 0.0
    %514 = vmatprep.subr.mxu0 0.0
    %515 = vmatpush1.msra.mxu0 0.0
    %516 = vmatprep.subr.mxu0 0.0
    %517 = vmatpush1.msra.mxu0 0.0
    %518 = vmatprep.subr.mxu0 0.0
    %519 = vmatpush1.msra.mxu0 0.0
    %520 = vmatprep.subr.mxu0 0.0
    %521 = vmatpush1.msra.mxu0 0.0
    %522 = vmatprep.subr.mxu0 0.0
    %523 = vmatpush1.msra.mxu0 0.0
    %524 = vmatprep.subr.mxu0 0.0
    %525 = vmatpush1.msra.mxu0 0.0
    %526 = vmatprep.subr.mxu0 0.0
    %527 = vmatpush1.msra.mxu0 0.0
    %528 = vmatprep.subr.mxu0 0.0
    %529 = vmatpush1.msra.mxu0 0.0
    %530 = vmatprep.subr.mxu0 0.0
    %531 = vmatpush1.msra.mxu0 0.0
    %532 = vmatprep.subr.mxu0 0.0
    %533 = vmatpush1.msra.mxu0 0.0
    %534 = vmatprep.subr.mxu0 0.0
    %535 = vmatpush1.msra.mxu0 0.0
    %536 = vmatprep.subr.mxu0 0.0
    %537 = vmatpush1.msra.mxu0 0.0
    %538 = vmatprep.subr.mxu0 0.0
    %539 = vmatpush1.msra.mxu0 0.0
    %540 = vmatprep.subr.mxu0 0.0
    %541 = vmatpush1.msra.mxu0 0.0
    %542 = vmatprep.subr.mxu0 0.0
    %543 = vmatpush1.msra.mxu0 0.0
    %544 = vmatprep.subr.mxu0 0.0
    %545 = vmatpush1.msra.mxu0 0.0
    %546 = vmatprep.subr.mxu0 0.0
    %547 = vmatpush1.msra.mxu0 0.0
    %548 = vmatprep.subr.mxu0 0.0
    %549 = vmatpush1.msra.mxu0 0.0
    %550 = vmatprep.subr.mxu0 0.0
    %551 = vmatpush1.msra.mxu0 0.0
    %552 = vmatprep.subr.mxu0 0.0
    %553 = vmatpush1.msra.mxu0 0.0
    %554 = vmatprep.mubr.f32.mxu0 0.0
    %555 = vmatmul.mubr.f32.gmra.mrb[0].mxu0 %v488
    %v556 = vpop.f32.mrb[0].mxu0
    %v557 = vadd.f32 0.0, %v556
    %v558 = vpop.f32.mrb[0].mxu0
    %559 = vdwg.mxu0
    %v561 = vsel %vm464, %v486, 0
    %563 = vmatprep.subr.mxu0 0.0
    %564 = vmatpush1.msra.mxu0 %v306
    %565 = vmatprep.subr.mxu0 0.0
    %566 = vmatpush1.msra.mxu0 0.0
    %567 = vmatprep.subr.mxu0 0.0
    %568 = vmatpush1.msra.mxu0 0.0
    %569 = vmatprep.subr.mxu0 0.0
    %570 = vmatpush1.msra.mxu0 0.0
    %571 = vmatprep.subr.mxu0 0.0
    %572 = vmatpush1.msra.mxu0 0.0
    %573 = vmatprep.subr.mxu0 0.0
    %574 = vmatpush1.msra.mxu0 0.0
    %575 = vmatprep.subr.mxu0 0.0
    %576 = vmatpush1.msra.mxu0 0.0
    %577 = vmatprep.subr.mxu0 0.0
    %578 = vmatpush1.msra.mxu0 0.0
    %579 = vmatprep.subr.mxu0 0.0
    %580 = vmatpush1.msra.mxu0 0.0
    %581 = vmatprep.subr.mxu0 0.0
    %582 = vmatpush1.msra.mxu0 0.0
    %583 = vmatprep.subr.mxu0 0.0
    %584 = vmatpush1.msra.mxu0 0.0
    %585 = vmatprep.subr.mxu0 0.0
    %586 = vmatpush1.msra.mxu0 0.0
    %587 = vmatprep.subr.mxu0 0.0
    %588 = vmatpush1.msra.mxu0 0.0
    %589 = vmatprep.subr.mxu0 0.0
    %590 = vmatpush1.msra.mxu0 0.0
    %591 = vmatprep.subr.mxu0 0.0
    %592 = vmatpush1.msra.mxu0 0.0
    %593 = vmatprep.subr.mxu0 0.0
    %594 = vmatpush1.msra.mxu0 0.0
    %595 = vmatprep.subr.mxu0 0.0
    %596 = vmatpush1.msra.mxu0 0.0
    %597 = vmatprep.subr.mxu0 0.0
    %598 = vmatpush1.msra.mxu0 0.0
    %599 = vmatprep.subr.mxu0 0.0
    %600 = vmatpush1.msra.mxu0 0.0
    %601 = vmatprep.subr.mxu0 0.0
    %602 = vmatpush1.msra.mxu0 0.0
    %603 = vmatprep.subr.mxu0 0.0
    %604 = vmatpush1.msra.mxu0 0.0
    %605 = vmatprep.subr.mxu0 0.0
    %606 = vmatpush1.msra.mxu0 0.0
    %607 = vmatprep.subr.mxu0 0.0
    %608 = vmatpush1.msra.mxu0 0.0
    %609 = vmatprep.subr.mxu0 0.0
    %610 = vmatpush1.msra.mxu0 0.0
    %611 = vmatprep.subr.mxu0 0.0
    %612 = vmatpush1.msra.mxu0 0.0
    %613 = vmatprep.subr.mxu0 0.0
    %614 = vmatpush1.msra.mxu0 0.0
    %615 = vmatprep.subr.mxu0 0.0
    %616 = vmatpush1.msra.mxu0 0.0
    %617 = vmatprep.subr.mxu0 0.0
    %618 = vmatpush1.msra.mxu0 0.0
    %619 = vmatprep.subr.mxu0 0.0
    %620 = vmatpush1.msra.mxu0 0.0
    %621 = vmatprep.subr.mxu0 0.0
    %622 = vmatpush1.msra.mxu0 0.0
    %623 = vmatprep.subr.mxu0 0.0
    %624 = vmatpush1.msra.mxu0 0.0
    %625 = vmatprep.subr.mxu0 0.0
    %626 = vmatpush1.msra.mxu0 0.0
    %627 = vmatprep.mubr.f32.mxu0 0.0
    %628 = vmatmul.mubr.f32.gmra.mrb[0].mxu0 %v561
    %v629 = vpop.f32.mrb[0].mxu0
    %v630 = vadd.f32 0.0, %v629
    %v631 = vpop.f32.mrb[0].mxu0
    %632 = vdwg.mxu0
    %633 = vrot.lane.b32.xlu0 %v137, 112
    %v634 = vpop.permute.xlu0 %633
    %635 = vrot.lane.b32.xlu0 %v222, 112
    %v636 = vpop.permute.xlu0 %635
    %v637 = vsel %vm309, %v634, 0
    %v639 = vsel %vm309, %v636, 0
    %641 = vmatprep.subr.mxu0 0.0
    %642 = vmatpush1.xpose.msra.mxu0 %v639
    %643 = vmatprep.subr.mxu0 0.0
    %644 = vmatpush1.xpose.msra.mxu0 0.0
    %645 = vmatprep.subr.mxu0 0.0
    %646 = vmatpush1.xpose.msra.mxu0 0.0
    %647 = vmatprep.subr.mxu0 0.0
    %648 = vmatpush1.xpose.msra.mxu0 0.0
    %649 = vmatprep.subr.mxu0 0.0
    %650 = vmatpush1.xpose.msra.mxu0 0.0
    %651 = vmatprep.subr.mxu0 0.0
    %652 = vmatpush1.xpose.msra.mxu0 0.0
    %653 = vmatprep.subr.mxu0 0.0
    %654 = vmatpush1.xpose.msra.mxu0 0.0
    %655 = vmatprep.subr.mxu0 0.0
    %656 = vmatpush1.xpose.msra.mxu0 0.0
    %657 = vmatprep.subr.mxu0 0.0
    %658 = vmatpush1.xpose.msra.mxu0 0.0
    %659 = vmatprep.subr.mxu0 0.0
    %660 = vmatpush1.xpose.msra.mxu0 0.0
    %661 = vmatprep.subr.mxu0 0.0
    %662 = vmatpush1.xpose.msra.mxu0 0.0
    %663 = vmatprep.subr.mxu0 0.0
    %664 = vmatpush1.xpose.msra.mxu0 0.0
    %665 = vmatprep.subr.mxu0 0.0
    %666 = vmatpush1.xpose.msra.mxu0 0.0
    %667 = vmatprep.subr.mxu0 0.0
    %668 = vmatpush1.xpose.msra.mxu0 0.0
    %669 = vmatprep.subr.mxu0 0.0
    %670 = vmatpush1.xpose.msra.mxu0 0.0
    %671 = vmatprep.subr.mxu0 0.0
    %672 = vmatpush1.xpose.msra.mxu0 0.0
    %673 = vmatprep.subr.mxu0 0.0
    %674 = vmatpush1.xpose.msra.mxu0 0.0
    %675 = vmatprep.subr.mxu0 0.0
    %676 = vmatpush1.xpose.msra.mxu0 0.0
    %677 = vmatprep.subr.mxu0 0.0
    %678 = vmatpush1.xpose.msra.mxu0 0.0
    %679 = vmatprep.subr.mxu0 0.0
    %680 = vmatpush1.xpose.msra.mxu0 0.0
    %681 = vmatprep.subr.mxu0 0.0
    %682 = vmatpush1.xpose.msra.mxu0 0.0
    %683 = vmatprep.subr.mxu0 0.0
    %684 = vmatpush1.xpose.msra.mxu0 0.0
    %685 = vmatprep.subr.mxu0 0.0
    %686 = vmatpush1.xpose.msra.mxu0 0.0
    %687 = vmatprep.subr.mxu0 0.0
    %688 = vmatpush1.xpose.msra.mxu0 0.0
    %689 = vmatprep.subr.mxu0 0.0
    %690 = vmatpush1.xpose.msra.mxu0 0.0
    %691 = vmatprep.subr.mxu0 0.0
    %692 = vmatpush1.xpose.msra.mxu0 0.0
    %693 = vmatprep.subr.mxu0 0.0
    %694 = vmatpush1.xpose.msra.mxu0 0.0
    %695 = vmatprep.subr.mxu0 0.0
    %696 = vmatpush1.xpose.msra.mxu0 0.0
    %697 = vmatprep.subr.mxu0 0.0
    %698 = vmatpush1.xpose.msra.mxu0 0.0
    %699 = vmatprep.subr.mxu0 0.0
    %700 = vmatpush1.xpose.msra.mxu0 0.0
    %701 = vmatprep.subr.mxu0 0.0
    %702 = vmatpush1.xpose.msra.mxu0 0.0
    %703 = vmatprep.subr.mxu0 0.0
    %704 = vmatpush1.xpose.msra.mxu0 0.0
    %705 = vmatprep.mubr.f32.mxu0 0.0
    %706 = vmatmul.mubr.f32.gmra.mrb[0].mxu0 %v637
    %v707 = vpop.f32.mrb[0].mxu0
    %v708 = vadd.f32 0.0, %v707
    %v709 = vpop.f32.mrb[0].mxu0
    %710 = vdwg.mxu0
    %711 = vrot.lane.b32.xlu0 %v142, 112
    %v712 = vpop.permute.xlu0 %711
    %713 = vrot.lane.b32.xlu0 %v227, 112
    %v714 = vpop.permute.xlu0 %713
    %v715 = vsel %vm309, %v712, 0
    %v717 = vsel %vm309, %v714, 0
    %719 = vmatprep.subr.mxu0 0.0
    %720 = vmatpush1.xpose.msra.mxu0 %v717
    %721 = vmatprep.subr.mxu0 0.0
    %722 = vmatpush1.xpose.msra.mxu0 0.0
    %723 = vmatprep.subr.mxu0 0.0
    %724 = vmatpush1.xpose.msra.mxu0 0.0
    %725 = vmatprep.subr.mxu0 0.0
    %726 = vmatpush1.xpose.msra.mxu0 0.0
    %727 = vmatprep.subr.mxu0 0.0
    %728 = vmatpush1.xpose.msra.mxu0 0.0
    %729 = vmatprep.subr.mxu0 0.0
    %730 = vmatpush1.xpose.msra.mxu0 0.0
    %731 = vmatprep.subr.mxu0 0.0
    %732 = vmatpush1.xpose.msra.mxu0 0.0
    %733 = vmatprep.subr.mxu0 0.0
    %734 = vmatpush1.xpose.msra.mxu0 0.0
    %735 = vmatprep.subr.mxu0 0.0
    %736 = vmatpush1.xpose.msra.mxu0 0.0
    %737 = vmatprep.subr.mxu0 0.0
    %738 = vmatpush1.xpose.msra.mxu0 0.0
    %739 = vmatprep.subr.mxu0 0.0
    %740 = vmatpush1.xpose.msra.mxu0 0.0
    %741 = vmatprep.subr.mxu0 0.0
    %742 = vmatpush1.xpose.msra.mxu0 0.0
    %743 = vmatprep.subr.mxu0 0.0
    %744 = vmatpush1.xpose.msra.mxu0 0.0
    %745 = vmatprep.subr.mxu0 0.0
    %746 = vmatpush1.xpose.msra.mxu0 0.0
    %747 = vmatprep.subr.mxu0 0.0
    %748 = vmatpush1.xpose.msra.mxu0 0.0
    %749 = vmatprep.subr.mxu0 0.0
    %750 = vmatpush1.xpose.msra.mxu0 0.0
    %751 = vmatprep.subr.mxu0 0.0
    %752 = vmatpush1.xpose.msra.mxu0 0.0
    %753 = vmatprep.subr.mxu0 0.0
    %754 = vmatpush1.xpose.msra.mxu0 0.0
    %755 = vmatprep.subr.mxu0 0.0
    %756 = vmatpush1.xpose.msra.mxu0 0.0
    %757 = vmatprep.subr.mxu0 0.0
    %758 = vmatpush1.xpose.msra.mxu0 0.0
    %759 = vmatprep.subr.mxu0 0.0
    %760 = vmatpush1.xpose.msra.mxu0 0.0
    %761 = vmatprep.subr.mxu0 0.0
    %762 = vmatpush1.xpose.msra.mxu0 0.0
    %763 = vmatprep.subr.mxu0 0.0
    %764 = vmatpush1.xpose.msra.mxu0 0.0
    %765 = vmatprep.subr.mxu0 0.0
    %766 = vmatpush1.xpose.msra.mxu0 0.0
    %767 = vmatprep.subr.mxu0 0.0
    %768 = vmatpush1.xpose.msra.mxu0 0.0
    %769 = vmatprep.subr.mxu0 0.0
    %770 = vmatpush1.xpose.msra.mxu0 0.0
    %771 = vmatprep.subr.mxu0 0.0
    %772 = vmatpush1.xpose.msra.mxu0 0.0
    %773 = vmatprep.subr.mxu0 0.0
    %774 = vmatpush1.xpose.msra.mxu0 0.0
    %775 = vmatprep.subr.mxu0 0.0
    %776 = vmatpush1.xpose.msra.mxu0 0.0
    %777 = vmatprep.subr.mxu0 0.0
    %778 = vmatpush1.xpose.msra.mxu0 0.0
    %779 = vmatprep.subr.mxu0 0.0
    %780 = vmatpush1.xpose.msra.mxu0 0.0
    %781 = vmatprep.subr.mxu0 0.0
    %782 = vmatpush1.xpose.msra.mxu0 0.0
    %783 = vmatprep.mubr.f32.mxu0 0.0
    %784 = vmatmul.mubr.f32.gmra.mrb[0].mxu0 %v715
    %v785 = vpop.f32.mrb[0].mxu0
    %v786 = vadd.f32 0.0, %v785
    %v787 = vpop.f32.mrb[0].mxu0
    %788 = vdwg.mxu0
    %v789 = vmul.f32 %v708, 0.25
    %v790 = vmul.f32 %v786, 0.25
    %v791 = vsel %vm464, %v789, -inf
    %792 = vmax.xlane.f32.xlu0 %v791
    %v793 = vpop.xlane.xlu0 %792
    %v794 = vsel %vm464, %v790, -inf
    %795 = vmax.xlane.f32.xlu0 %v794
    %v796 = vpop.xlane.xlu0 %795
    %v797 = vsub.f32 %v789, %v793
    %v798 = vsub.f32 %v790, %v796
    %v799 = vmul.f32 %v797, 1.442695
    %v800 = vpow.pop %v799
    %v801 = vmul.f32 %v798, 1.442695
    %v802 = vpow.pop %v801
    %v803 = vsel %vm464, %v800, 0.0
    %804 = vadd.xlane.f32.xlu0 %v803
    %v805 = vpop.xlane.xlu0 %804
    %v806 = vsel %vm464, %v802, 0.0
    %807 = vadd.xlane.f32.xlu0 %v806
    %v808 = vpop.xlane.xlu0 %807
    %v809 = vrcp.pop %v805
    %v810 = vmul.f32 %v800, %v809
    %v811 = vrcp.pop %v808
    %v812 = vmul.f32 %v802, %v811
    %814 = vrot.lane.b32.xlu0 %v301, 112
    %v815 = vpop.permute.xlu0 %814
    %v818 = vsel %vm464, %v810, 0
    %820 = vmatprep.subr.mxu0 0.0
    %821 = vmatpush1.msra.mxu0 %v815
    %822 = vmatprep.subr.mxu0 0.0
    %823 = vmatpush1.msra.mxu0 0.0
    %824 = vmatprep.subr.mxu0 0.0
    %825 = vmatpush1.msra.mxu0 0.0
    %826 = vmatprep.subr.mxu0 0.0
    %827 = vmatpush1.msra.mxu0 0.0
    %828 = vmatprep.subr.mxu0 0.0
    %829 = vmatpush1.msra.mxu0 0.0
    %830 = vmatprep.subr.mxu0 0.0
    %831 = vmatpush1.msra.mxu0 0.0
    %832 = vmatprep.subr.mxu0 0.0
    %833 = vmatpush1.msra.mxu0 0.0
    %834 = vmatprep.subr.mxu0 0.0
    %835 = vmatpush1.msra.mxu0 0.0
    %836 = vmatprep.subr.mxu0 0.0
    %837 = vmatpush1.msra.mxu0 0.0
    %838 = vmatprep.subr.mxu0 0.0
    %839 = vmatpush1.msra.mxu0 0.0
    %840 = vmatprep.subr.mxu0 0.0
    %841 = vmatpush1.msra.mxu0 0.0
    %842 = vmatprep.subr.mxu0 0.0
    %843 = vmatpush1.msra.mxu0 0.0
    %844 = vmatprep.subr.mxu0 0.0
    %845 = vmatpush1.msra.mxu0 0.0
    %846 = vmatprep.subr.mxu0 0.0
    %847 = vmatpush1.msra.mxu0 0.0
    %848 = vmatprep.subr.mxu0 0.0
    %849 = vmatpush1.msra.mxu0 0.0
    %850 = vmatprep.subr.mxu0 0.0
    %851 = vmatpush1.msra.mxu0 0.0
    %852 = vmatprep.subr.mxu0 0.0
    %853 = vmatpush1.msra.mxu0 0.0
    %854 = vmatprep.subr.mxu0 0.0
    %855 = vmatpush1.msra.mxu0 0.0
    %856 = vmatprep.subr.mxu0 0.0
    %857 = vmatpush1.msra.mxu0 0.0
    %858 = vmatprep.subr.mxu0 0.0
    %859 = vmatpush1.msra.mxu0 0.0
    %860 = vmatprep.subr.mxu0 0.0
    %861 = vmatpush1.msra.mxu0 0.0
    %862 = vmatprep.subr.mxu0 0.0
    %863 = vmatpush1.msra.mxu0 0.0
    %864 = vmatprep.subr.mxu0 0.0
    %865 = vmatpush1.msra.mxu0 0.0
    %866 = vmatprep.subr.mxu0 0.0
    %867 = vmatpush1.msra.mxu0 0.0
    %868 = vmatprep.subr.mxu0 0.0
    %869 = vmatpush1.msra.mxu0 0.0
    %870 = vmatprep.subr.mxu0 0.0
    %871 = vmatpush1.msra.mxu0 0.0
    %872 = vmatprep.subr.mxu0 0.0
    %873 = vmatpush1.msra.mxu0 0.0
    %874 = vmatprep.subr.mxu0 0.0
    %875 = vmatpush1.msra.mxu0 0.0
    %876 = vmatprep.subr.mxu0 0.0
    %877 = vmatpush1.msra.mxu0 0.0
    %878 = vmatprep.subr.mxu0 0.0
    %879 = vmatpush1.msra.mxu0 0.0
    %880 = vmatprep.subr.mxu0 0.0
    %881 = vmatpush1.msra.mxu0 0.0
    %882 = vmatprep.subr.mxu0 0.0
    %883 = vmatpush1.msra.mxu0 0.0
    %884 = vmatprep.mubr.f32.mxu0 0.0
    %885 = vmatmul.mubr.f32.gmra.mrb[0].mxu0 %v818
    %v886 = vpop.f32.mrb[0].mxu0
    %v887 = vadd.f32 0.0, %v886
    %v888 = vpop.f32.mrb[0].mxu0
    %889 = vdwg.mxu0
    %891 = vrot.lane.b32.xlu0 %v306, 112
    %v892 = vpop.permute.xlu0 %891
    %v895 = vsel %vm464, %v812, 0
    %897 = vmatprep.subr.mxu0 0.0
    %898 = vmatpush1.msra.mxu0 %v892
    %899 = vmatprep.subr.mxu0 0.0
    %900 = vmatpush1.msra.mxu0 0.0
    %901 = vmatprep.subr.mxu0 0.0
    %902 = vmatpush1.msra.mxu0 0.0
    %903 = vmatprep.subr.mxu0 0.0
    %904 = vmatpush1.msra.mxu0 0.0
    %905 = vmatprep.subr.mxu0 0.0
    %906 = vmatpush1.msra.mxu0 0.0
    %907 = vmatprep.subr.mxu0 0.0
    %908 = vmatpush1.msra.mxu0 0.0
    %909 = vmatprep.subr.mxu0 0.0
    %910 = vmatpush1.msra.mxu0 0.0
    %911 = vmatprep.subr.mxu0 0.0
    %912 = vmatpush1.msra.mxu0 0.0
    %913 = vmatprep.subr.mxu0 0.0
    %914 = vmatpush1.msra.mxu0 0.0
    %915 = vmatprep.subr.mxu0 0.0
    %916 = vmatpush1.msra.mxu0 0.0
    %917 = vmatprep.subr.mxu0 0.0
    %918 = vmatpush1.msra.mxu0 0.0
    %919 = vmatprep.subr.mxu0 0.0
    %920 = vmatpush1.msra.mxu0 0.0
    %921 = vmatprep.subr.mxu0 0.0
    %922 = vmatpush1.msra.mxu0 0.0
    %923 = vmatprep.subr.mxu0 0.0
    %924 = vmatpush1.msra.mxu0 0.0
    %925 = vmatprep.subr.mxu0 0.0
    %926 = vmatpush1.msra.mxu0 0.0
    %927 = vmatprep.subr.mxu0 0.0
    %928 = vmatpush1.msra.mxu0 0.0
    %929 = vmatprep.subr.mxu0 0.0
    %930 = vmatpush1.msra.mxu0 0.0
    %931 = vmatprep.subr.mxu0 0.0
    %932 = vmatpush1.msra.mxu0 0.0
    %933 = vmatprep.subr.mxu0 0.0
    %934 = vmatpush1.msra.mxu0 0.0
    %935 = vmatprep.subr.mxu0 0.0
    %936 = vmatpush1.msra.mxu0 0.0
    %937 = vmatprep.subr.mxu0 0.0
    %938 = vmatpush1.msra.mxu0 0.0
    %939 = vmatprep.subr.mxu0 0.0
    %940 = vmatpush1.msra.mxu0 0.0
    %941 = vmatprep.subr.mxu0 0.0
    %942 = vmatpush1.msra.mxu0 0.0
    %943 = vmatprep.subr.mxu0 0.0
    %944 = vmatpush1.msra.mxu0 0.0
    %945 = vmatprep.subr.mxu0 0.0
    %946 = vmatpush1.msra.mxu0 0.0
    %947 = vmatprep.subr.mxu0 0.0
    %948 = vmatpush1.msra.mxu0 0.0
    %949 = vmatprep.subr.mxu0 0.0
    %950 = vmatpush1.msra.mxu0 0.0
    %951 = vmatprep.subr.mxu0 0.0
    %952 = vmatpush1.msra.mxu0 0.0
    %953 = vmatprep.subr.mxu0 0.0
    %954 = vmatpush1.msra.mxu0 0.0
    %955 = vmatprep.subr.mxu0 0.0
    %956 = vmatpush1.msra.mxu0 0.0
    %957 = vmatprep.subr.mxu0 0.0
    %958 = vmatpush1.msra.mxu0 0.0
    %959 = vmatprep.subr.mxu0 0.0
    %960 = vmatpush1.msra.mxu0 0.0
    %961 = vmatprep.mubr.f32.mxu0 0.0
    %962 = vmatmul.mubr.f32.gmra.mrb[0].mxu0 %v895
    %v963 = vpop.f32.mrb[0].mxu0
    %v964 = vadd.f32 0.0, %v963
    %v965 = vpop.f32.mrb[0].mxu0
    %966 = vdwg.mxu0
    %967 = vrot.lane.b32.xlu0 %v137, 96
    %v968 = vpop.permute.xlu0 %967
    %969 = vrot.lane.b32.xlu0 %v222, 96
    %v970 = vpop.permute.xlu0 %969
    %v971 = vsel %vm309, %v968, 0
    %v973 = vsel %vm309, %v970, 0
    %975 = vmatprep.subr.mxu0 0.0
    %976 = vmatpush1.xpose.msra.mxu0 %v973
    %977 = vmatprep.subr.mxu0 0.0
    %978 = vmatpush1.xpose.msra.mxu0 0.0
    %979 = vmatprep.subr.mxu0 0.0
    %980 = vmatpush1.xpose.msra.mxu0 0.0
    %981 = vmatprep.subr.mxu0 0.0
    %982 = vmatpush1.xpose.msra.mxu0 0.0
    %983 = vmatprep.subr.mxu0 0.0
    %984 = vmatpush1.xpose.msra.mxu0 0.0
    %985 = vmatprep.subr.mxu0 0.0
    %986 = vmatpush1.xpose.msra.mxu0 0.0
    %987 = vmatprep.subr.mxu0 0.0
    %988 = vmatpush1.xpose.msra.mxu0 0.0
    %989 = vmatprep.subr.mxu0 0.0
    %990 = vmatpush1.xpose.msra.mxu0 0.0
    %991 = vmatprep.subr.mxu0 0.0
    %992 = vmatpush1.xpose.msra.mxu0 0.0
    %993 = vmatprep.subr.mxu0 0.0
    %994 = vmatpush1.xpose.msra.mxu0 0.0
    %995 = vmatprep.subr.mxu0 0.0
    %996 = vmatpush1.xpose.msra.mxu0 0.0
    %997 = vmatprep.subr.mxu0 0.0
    %998 = vmatpush1.xpose.msra.mxu0 0.0
    %999 = vmatprep.subr.mxu0 0.0
    %1000 = vmatpush1.xpose.msra.mxu0 0.0
    %1001 = vmatprep.subr.mxu0 0.0
    %1002 = vmatpush1.xpose.msra.mxu0 0.0
    %1003 = vmatprep.subr.mxu0 0.0
    %1004 = vmatpush1.xpose.msra.mxu0 0.0
    %1005 = vmatprep.subr.mxu0 0.0
    %1006 = vmatpush1.xpose.msra.mxu0 0.0
    %1007 = vmatprep.subr.mxu0 0.0
    %1008 = vmatpush1.xpose.msra.mxu0 0.0
    %1009 = vmatprep.subr.mxu0 0.0
    %1010 = vmatpush1.xpose.msra.mxu0 0.0
    %1011 = vmatprep.subr.mxu0 0.0
    %1012 = vmatpush1.xpose.msra.mxu0 0.0
    %1013 = vmatprep.subr.mxu0 0.0
    %1014 = vmatpush1.xpose.msra.mxu0 0.0
    %1015 = vmatprep.subr.mxu0 0.0
    %1016 = vmatpush1.xpose.msra.mxu0 0.0
    %1017 = vmatprep.subr.mxu0 0.0
    %1018 = vmatpush1.xpose.msra.mxu0 0.0
    %1019 = vmatprep.subr.mxu0 0.0
    %1020 = vmatpush1.xpose.msra.mxu0 0.0
    %1021 = vmatprep.subr.mxu0 0.0
    %1022 = vmatpush1.xpose.msra.mxu0 0.0
    %1023 = vmatprep.subr.mxu0 0.0
    %1024 = vmatpush1.xpose.msra.mxu0 0.0
    %1025 = vmatprep.subr.mxu0 0.0
    %1026 = vmatpush1.xpose.msra.mxu0 0.0
    %1027 = vmatprep.subr.mxu0 0.0
    %1028 = vmatpush1.xpose.msra.mxu0 0.0
    %1029 = vmatprep.subr.mxu0 0.0
    %1030 = vmatpush1.xpose.msra.mxu0 0.0
    %1031 = vmatprep.subr.mxu0 0.0
    %1032 = vmatpush1.xpose.msra.mxu0 0.0
    %1033 = vmatprep.subr.mxu0 0.0
    %1034 = vmatpush1.xpose.msra.mxu0 0.0
    %1035 = vmatprep.subr.mxu0 0.0
    %1036 = vmatpush1.xpose.msra.mxu0 0.0
    %1037 = vmatprep.subr.mxu0 0.0
    %1038 = vmatpush1.xpose.msra.mxu0 0.0
    %1039 = vmatprep.mubr.f32.mxu0 0.0
    %1040 = vmatmul.mubr.f32.gmra.mrb[0].mxu0 %v971
    %v1041 = vpop.f32.mrb[0].mxu0
    %v1042 = vadd.f32 0.0, %v1041
    %v1043 = vpop.f32.mrb[0].mxu0
    %1044 = vdwg.mxu0
    %1045 = vrot.lane.b32.xlu0 %v142, 96
    %v1046 = vpop.permute.xlu0 %1045
    %1047 = vrot.lane.b32.xlu0 %v227, 96
    %v1048 = vpop.permute.xlu0 %1047
    %v1049 = vsel %vm309, %v1046, 0
    %v1051 = vsel %vm309, %v1048, 0
    %1053 = vmatprep.subr.mxu0 0.0
    %1054 = vmatpush1.xpose.msra.mxu0 %v1051
    %1055 = vmatprep.subr.mxu0 0.0
    %1056 = vmatpush1.xpose.msra.mxu0 0.0
    %1057 = vmatprep.subr.mxu0 0.0
    %1058 = vmatpush1.xpose.msra.mxu0 0.0
    %1059 = vmatprep.subr.mxu0 0.0
    %1060 = vmatpush1.xpose.msra.mxu0 0.0
    %1061 = vmatprep.subr.mxu0 0.0
    %1062 = vmatpush1.xpose.msra.mxu0 0.0
    %1063 = vmatprep.subr.mxu0 0.0
    %1064 = vmatpush1.xpose.msra.mxu0 0.0
    %1065 = vmatprep.subr.mxu0 0.0
    %1066 = vmatpush1.xpose.msra.mxu0 0.0
    %1067 = vmatprep.subr.mxu0 0.0
    %1068 = vmatpush1.xpose.msra.mxu0 0.0
    %1069 = vmatprep.subr.mxu0 0.0
    %1070 = vmatpush1.xpose.msra.mxu0 0.0
    %1071 = vmatprep.subr.mxu0 0.0
    %1072 = vmatpush1.xpose.msra.mxu0 0.0
    %1073 = vmatprep.subr.mxu0 0.0
    %1074 = vmatpush1.xpose.msra.mxu0 0.0
    %1075 = vmatprep.subr.mxu0 0.0
    %1076 = vmatpush1.xpose.msra.mxu0 0.0
    %1077 = vmatprep.subr.mxu0 0.0
    %1078 = vmatpush1.xpose.msra.mxu0 0.0
    %1079 = vmatprep.subr.mxu0 0.0
    %1080 = vmatpush1.xpose.msra.mxu0 0.0
    %1081 = vmatprep.subr.mxu0 0.0
    %1082 = vmatpush1.xpose.msra.mxu0 0.0
    %1083 = vmatprep.subr.mxu0 0.0
    %1084 = vmatpush1.xpose.msra.mxu0 0.0
    %1085 = vmatprep.subr.mxu0 0.0
    %1086 = vmatpush1.xpose.msra.mxu0 0.0
    %1087 = vmatprep.subr.mxu0 0.0
    %1088 = vmatpush1.xpose.msra.mxu0 0.0
    %1089 = vmatprep.subr.mxu0 0.0
    %1090 = vmatpush1.xpose.msra.mxu0 0.0
    %1091 = vmatprep.subr.mxu0 0.0
    %1092 = vmatpush1.xpose.msra.mxu0 0.0
    %1093 = vmatprep.subr.mxu0 0.0
    %1094 = vmatpush1.xpose.msra.mxu0 0.0
    %1095 = vmatprep.subr.mxu0 0.0
    %1096 = vmatpush1.xpose.msra.mxu0 0.0
    %1097 = vmatprep.subr.mxu0 0.0
    %1098 = vmatpush1.xpose.msra.mxu0 0.0
    %1099 = vmatprep.subr.mxu0 0.0
    %1100 = vmatpush1.xpose.msra.mxu0 0.0
    %1101 = vmatprep.subr.mxu0 0.0
    %1102 = vmatpush1.xpose.msra.mxu0 0.0
    %1103 = vmatprep.subr.mxu0 0.0
    %1104 = vmatpush1.xpose.msra.mxu0 0.0
    %1105 = vmatprep.subr.mxu0 0.0
    %1106 = vmatpush1.xpose.msra.mxu0 0.0
    %1107 = vmatprep.subr.mxu0 0.0
    %1108 = vmatpush1.xpose.msra.mxu0 0.0
    %1109 = vmatprep.subr.mxu0 0.0
    %1110 = vmatpush1.xpose.msra.mxu0 0.0
    %1111 = vmatprep.subr.mxu0 0.0
    %1112 = vmatpush1.xpose.msra.mxu0 0.0
    %1113 = vmatprep.subr.mxu0 0.0
    %1114 = vmatpush1.xpose.msra.mxu0 0.0
    %1115 = vmatprep.subr.mxu0 0.0
    %1116 = vmatpush1.xpose.msra.mxu0 0.0
    %1117 = vmatprep.mubr.f32.mxu0 0.0
    %1118 = vmatmul.mubr.f32.gmra.mrb[0].mxu0 %v1049
    %v1119 = vpop.f32.mrb[0].mxu0
    %v1120 = vadd.f32 0.0, %v1119
    %v1121 = vpop.f32.mrb[0].mxu0
    %1122 = vdwg.mxu0
    %v1123 = vmul.f32 %v1042, 0.25
    %v1124 = vmul.f32 %v1120, 0.25
    %v1125 = vsel %vm464, %v1123, -inf
    %1126 = vmax.xlane.f32.xlu0 %v1125
    %v1127 = vpop.xlane.xlu0 %1126
    %v1128 = vsel %vm464, %v1124, -inf
    %1129 = vmax.xlane.f32.xlu0 %v1128
    %v1130 = vpop.xlane.xlu0 %1129
    %v1131 = vsub.f32 %v1123, %v1127
    %v1132 = vsub.f32 %v1124, %v1130
    %v1133 = vmul.f32 %v1131, 1.442695
    %v1134 = vpow.pop %v1133
    %v1135 = vmul.f32 %v1132, 1.442695
    %v1136 = vpow.pop %v1135
    %v1137 = vsel %vm464, %v1134, 0.0
    %1138 = vadd.xlane.f32.xlu0 %v1137
    %v1139 = vpop.xlane.xlu0 %1138
    %v1140 = vsel %vm464, %v1136, 0.0
    %1141 = vadd.xlane.f32.xlu0 %v1140
    %v1142 = vpop.xlane.xlu0 %1141
    %v1143 = vrcp.pop %v1139
    %v1144 = vmul.f32 %v1134, %v1143
    %v1145 = vrcp.pop %v1142
    %v1146 = vmul.f32 %v1136, %v1145
    %1147 = vrot.lane.b32.xlu0 %v301, 96
    %v1148 = vpop.permute.xlu0 %1147
    %v1151 = vsel %vm464, %v1144, 0
    %1153 = vmatprep.subr.mxu0 0.0
    %1154 = vmatpush1.msra.mxu0 %v1148
    %1155 = vmatprep.subr.mxu0 0.0
    %1156 = vmatpush1.msra.mxu0 0.0
    %1157 = vmatprep.subr.mxu0 0.0
    %1158 = vmatpush1.msra.mxu0 0.0
    %1159 = vmatprep.subr.mxu0 0.0
    %1160 = vmatpush1.msra.mxu0 0.0
    %1161 = vmatprep.subr.mxu0 0.0
    %1162 = vmatpush1.msra.mxu0 0.0
    %1163 = vmatprep.subr.mxu0 0.0
    %1164 = vmatpush1.msra.mxu0 0.0
    %1165 = vmatprep.subr.mxu0 0.0
    %1166 = vmatpush1.msra.mxu0 0.0
    %1167 = vmatprep.subr.mxu0 0.0
    %1168 = vmatpush1.msra.mxu0 0.0
    %1169 = vmatprep.subr.mxu0 0.0
    %1170 = vmatpush1.msra.mxu0 0.0
    %1171 = vmatprep.subr.mxu0 0.0
    %1172 = vmatpush1.msra.mxu0 0.0
    %1173 = vmatprep.subr.mxu0 0.0
    %1174 = vmatpush1.msra.mxu0 0.0
    %1175 = vmatprep.subr.mxu0 0.0
    %1176 = vmatpush1.msra.mxu0 0.0
    %1177 = vmatprep.subr.mxu0 0.0
    %1178 = vmatpush1.msra.mxu0 0.0
    %1179 = vmatprep.subr.mxu0 0.0
    %1180 = vmatpush1.msra.mxu0 0.0
    %1181 = vmatprep.subr.mxu0 0.0
    %1182 = vmatpush1.msra.mxu0 0.0
    %1183 = vmatprep.subr.mxu0 0.0
    %1184 = vmatpush1.msra.mxu0 0.0
    %1185 = vmatprep.subr.mxu0 0.0
    %1186 = vmatpush1.msra.mxu0 0.0
    %1187 = vmatprep.subr.mxu0 0.0
    %1188 = vmatpush1.msra.mxu0 0.0
    %1189 = vmatprep.subr.mxu0 0.0
    %1190 = vmatpush1.msra.mxu0 0.0
    %1191 = vmatprep.subr.mxu0 0.0
    %1192 = vmatpush1.msra.mxu0 0.0
    %1193 = vmatprep.subr.mxu0 0.0
    %1194 = vmatpush1.msra.mxu0 0.0
    %1195 = vmatprep.subr.mxu0 0.0
    %1196 = vmatpush1.msra.mxu0 0.0
    %1197 = vmatprep.subr.mxu0 0.0
    %1198 = vmatpush1.msra.mxu0 0.0
    %1199 = vmatprep.subr.mxu0 0.0
    %1200 = vmatpush1.msra.mxu0 0.0
    %1201 = vmatprep.subr.mxu0 0.0
    %1202 = vmatpush1.msra.mxu0 0.0
    %1203 = vmatprep.subr.mxu0 0.0
    %1204 = vmatpush1.msra.mxu0 0.0
    %1205 = vmatprep.subr.mxu0 0.0
    %1206 = vmatpush1.msra.mxu0 0.0
    %1207 = vmatprep.subr.mxu0 0.0
    %1208 = vmatpush1.msra.mxu0 0.0
    %1209 = vmatprep.subr.mxu0 0.0
    %1210 = vmatpush1.msra.mxu0 0.0
    %1211 = vmatprep.subr.mxu0 0.0
    %1212 = vmatpush1.msra.mxu0 0.0
    %1213 = vmatprep.subr.mxu0 0.0
    %1214 = vmatpush1.msra.mxu0 0.0
    %1215 = vmatprep.subr.mxu0 0.0
    %1216 = vmatpush1.msra.mxu0 0.0
    %1217 = vmatprep.mubr.f32.mxu0 0.0
    %1218 = vmatmul.mubr.f32.gmra.mrb[0].mxu0 %v1151
    %v1219 = vpop.f32.mrb[0].mxu0
    %v1220 = vadd.f32 0.0, %v1219
    %v1221 = vpop.f32.mrb[0].mxu0
    %1222 = vdwg.mxu0
    %1223 = vrot.lane.b32.xlu0 %v306, 96
    %v1224 = vpop.permute.xlu0 %1223
    %v1227 = vsel %vm464, %v1146, 0
    %1229 = vmatprep.subr.mxu0 0.0
    %1230 = vmatpush1.msra.mxu0 %v1224
    %1231 = vmatprep.subr.mxu0 0.0
    %1232 = vmatpush1.msra.mxu0 0.0
    %1233 = vmatprep.subr.mxu0 0.0
    %1234 = vmatpush1.msra.mxu0 0.0
    %1235 = vmatprep.subr.mxu0 0.0
    %1236 = vmatpush1.msra.mxu0 0.0
    %1237 = vmatprep.subr.mxu0 0.0
    %1238 = vmatpush1.msra.mxu0 0.0
    %1239 = vmatprep.subr.mxu0 0.0
    %1240 = vmatpush1.msra.mxu0 0.0
    %1241 = vmatprep.subr.mxu0 0.0
    %1242 = vmatpush1.msra.mxu0 0.0
    %1243 = vmatprep.subr.mxu0 0.0
    %1244 = vmatpush1.msra.mxu0 0.0
    %1245 = vmatprep.subr.mxu0 0.0
    %1246 = vmatpush1.msra.mxu0 0.0
    %1247 = vmatprep.subr.mxu0 0.0
    %1248 = vmatpush1.msra.mxu0 0.0
    %1249 = vmatprep.subr.mxu0 0.0
    %1250 = vmatpush1.msra.mxu0 0.0
    %1251 = vmatprep.subr.mxu0 0.0
    %1252 = vmatpush1.msra.mxu0 0.0
    %1253 = vmatprep.subr.mxu0 0.0
    %1254 = vmatpush1.msra.mxu0 0.0
    %1255 = vmatprep.subr.mxu0 0.0
    %1256 = vmatpush1.msra.mxu0 0.0
    %1257 = vmatprep.subr.mxu0 0.0
    %1258 = vmatpush1.msra.mxu0 0.0
    %1259 = vmatprep.subr.mxu0 0.0
    %1260 = vmatpush1.msra.mxu0 0.0
    %1261 = vmatprep.subr.mxu0 0.0
    %1262 = vmatpush1.msra.mxu0 0.0
    %1263 = vmatprep.subr.mxu0 0.0
    %1264 = vmatpush1.msra.mxu0 0.0
    %1265 = vmatprep.subr.mxu0 0.0
    %1266 = vmatpush1.msra.mxu0 0.0
    %1267 = vmatprep.subr.mxu0 0.0
    %1268 = vmatpush1.msra.mxu0 0.0
    %1269 = vmatprep.subr.mxu0 0.0
    %1270 = vmatpush1.msra.mxu0 0.0
    %1271 = vmatprep.subr.mxu0 0.0
    %1272 = vmatpush1.msra.mxu0 0.0
    %1273 = vmatprep.subr.mxu0 0.0
    %1274 = vmatpush1.msra.mxu0 0.0
    %1275 = vmatprep.subr.mxu0 0.0
    %1276 = vmatpush1.msra.mxu0 0.0
    %1277 = vmatprep.subr.mxu0 0.0
    %1278 = vmatpush1.msra.mxu0 0.0
    %1279 = vmatprep.subr.mxu0 0.0
    %1280 = vmatpush1.msra.mxu0 0.0
    %1281 = vmatprep.subr.mxu0 0.0
    %1282 = vmatpush1.msra.mxu0 0.0
    %1283 = vmatprep.subr.mxu0 0.0
    %1284 = vmatpush1.msra.mxu0 0.0
    %1285 = vmatprep.subr.mxu0 0.0
    %1286 = vmatpush1.msra.mxu0 0.0
    %1287 = vmatprep.subr.mxu0 0.0
    %1288 = vmatpush1.msra.mxu0 0.0
    %1289 = vmatprep.subr.mxu0 0.0
    %1290 = vmatpush1.msra.mxu0 0.0
    %1291 = vmatprep.subr.mxu0 0.0
    %1292 = vmatpush1.msra.mxu0 0.0
    %1293 = vmatprep.mubr.f32.mxu0 0.0
    %1294 = vmatmul.mubr.f32.gmra.mrb[0].mxu0 %v1227
    %v1295 = vpop.f32.mrb[0].mxu0
    %v1296 = vadd.f32 0.0, %v1295
    %v1297 = vpop.f32.mrb[0].mxu0
    %1298 = vdwg.mxu0
    %1299 = vrot.lane.b32.xlu0 %v137, 80
    %v1300 = vpop.permute.xlu0 %1299
    %1301 = vrot.lane.b32.xlu0 %v222, 80
    %v1302 = vpop.permute.xlu0 %1301
    %v1303 = vsel %vm309, %v1300, 0
    %v1305 = vsel %vm309, %v1302, 0
    %1307 = vmatprep.subr.mxu0 0.0
    %1308 = vmatpush1.xpose.msra.mxu0 %v1305
    %1309 = vmatprep.subr.mxu0 0.0
    %1310 = vmatpush1.xpose.msra.mxu0 0.0
    %1311 = vmatprep.subr.mxu0 0.0
    %1312 = vmatpush1.xpose.msra.mxu0 0.0
    %1313 = vmatprep.subr.mxu0 0.0
    %1314 = vmatpush1.xpose.msra.mxu0 0.0
    %1315 = vmatprep.subr.mxu0 0.0
    %1316 = vmatpush1.xpose.msra.mxu0 0.0
    %1317 = vmatprep.subr.mxu0 0.0
    %1318 = vmatpush1.xpose.msra.mxu0 0.0
    %1319 = vmatprep.subr.mxu0 0.0
    %1320 = vmatpush1.xpose.msra.mxu0 0.0
    %1321 = vmatprep.subr.mxu0 0.0
    %1322 = vmatpush1.xpose.msra.mxu0 0.0
    %1323 = vmatprep.subr.mxu0 0.0
    %1324 = vmatpush1.xpose.msra.mxu0 0.0
    %1325 = vmatprep.subr.mxu0 0.0
    %1326 = vmatpush1.xpose.msra.mxu0 0.0
    %1327 = vmatprep.subr.mxu0 0.0
    %1328 = vmatpush1.xpose.msra.mxu0 0.0
    %1329 = vmatprep.subr.mxu0 0.0
    %1330 = vmatpush1.xpose.msra.mxu0 0.0
    %1331 = vmatprep.subr.mxu0 0.0
    %1332 = vmatpush1.xpose.msra.mxu0 0.0
    %1333 = vmatprep.subr.mxu0 0.0
    %1334 = vmatpush1.xpose.msra.mxu0 0.0
    %1335 = vmatprep.subr.mxu0 0.0
    %1336 = vmatpush1.xpose.msra.mxu0 0.0
    %1337 = vmatprep.subr.mxu0 0.0
    %1338 = vmatpush1.xpose.msra.mxu0 0.0
    %1339 = vmatprep.subr.mxu0 0.0
    %1340 = vmatpush1.xpose.msra.mxu0 0.0
    %1341 = vmatprep.subr.mxu0 0.0
    %1342 = vmatpush1.xpose.msra.mxu0 0.0
    %1343 = vmatprep.subr.mxu0 0.0
    %1344 = vmatpush1.xpose.msra.mxu0 0.0
    %1345 = vmatprep.subr.mxu0 0.0
    %1346 = vmatpush1.xpose.msra.mxu0 0.0
    %1347 = vmatprep.subr.mxu0 0.0
    %1348 = vmatpush1.xpose.msra.mxu0 0.0
    %1349 = vmatprep.subr.mxu0 0.0
    %1350 = vmatpush1.xpose.msra.mxu0 0.0
    %1351 = vmatprep.subr.mxu0 0.0
    %1352 = vmatpush1.xpose.msra.mxu0 0.0
    %1353 = vmatprep.subr.mxu0 0.0
    %1354 = vmatpush1.xpose.msra.mxu0 0.0
    %1355 = vmatprep.subr.mxu0 0.0
    %1356 = vmatpush1.xpose.msra.mxu0 0.0
    %1357 = vmatprep.subr.mxu0 0.0
    %1358 = vmatpush1.xpose.msra.mxu0 0.0
    %1359 = vmatprep.subr.mxu0 0.0
    %1360 = vmatpush1.xpose.msra.mxu0 0.0
    %1361 = vmatprep.subr.mxu0 0.0
    %1362 = vmatpush1.xpose.msra.mxu0 0.0
    %1363 = vmatprep.subr.mxu0 0.0
    %1364 = vmatpush1.xpose.msra.mxu0 0.0
    %1365 = vmatprep.subr.mxu0 0.0
    %1366 = vmatpush1.xpose.msra.mxu0 0.0
    %1367 = vmatprep.subr.mxu0 0.0
    %1368 = vmatpush1.xpose.msra.mxu0 0.0
    %1369 = vmatprep.subr.mxu0 0.0
    %1370 = vmatpush1.xpose.msra.mxu0 0.0
    %1371 = vmatprep.mubr.f32.mxu0 0.0
    %1372 = vmatmul.mubr.f32.gmra.mrb[0].mxu0 %v1303
    %v1373 = vpop.f32.mrb[0].mxu0
    %v1374 = vadd.f32 0.0, %v1373
    %v1375 = vpop.f32.mrb[0].mxu0
    %1376 = vdwg.mxu0
    %1377 = vrot.lane.b32.xlu0 %v142, 80
    %v1378 = vpop.permute.xlu0 %1377
    %1379 = vrot.lane.b32.xlu0 %v227, 80
    %v1380 = vpop.permute.xlu0 %1379
    %v1381 = vsel %vm309, %v1378, 0
    %v1383 = vsel %vm309, %v1380, 0
    %1385 = vmatprep.subr.mxu0 0.0
    %1386 = vmatpush1.xpose.msra.mxu0 %v1383
    %1387 = vmatprep.subr.mxu0 0.0
    %1388 = vmatpush1.xpose.msra.mxu0 0.0
    %1389 = vmatprep.subr.mxu0 0.0
    %1390 = vmatpush1.xpose.msra.mxu0 0.0
    %1391 = vmatprep.subr.mxu0 0.0
    %1392 = vmatpush1.xpose.msra.mxu0 0.0
    %1393 = vmatprep.subr.mxu0 0.0
    %1394 = vmatpush1.xpose.msra.mxu0 0.0
    %1395 = vmatprep.subr.mxu0 0.0
    %1396 = vmatpush1.xpose.msra.mxu0 0.0
    %1397 = vmatprep.subr.mxu0 0.0
    %1398 = vmatpush1.xpose.msra.mxu0 0.0
    %1399 = vmatprep.subr.mxu0 0.0
    %1400 = vmatpush1.xpose.msra.mxu0 0.0
    %1401 = vmatprep.subr.mxu0 0.0
    %1402 = vmatpush1.xpose.msra.mxu0 0.0
    %1403 = vmatprep.subr.mxu0 0.0
    %1404 = vmatpush1.xpose.msra.mxu0 0.0
    %1405 = vmatprep.subr.mxu0 0.0
    %1406 = vmatpush1.xpose.msra.mxu0 0.0
    %1407 = vmatprep.subr.mxu0 0.0
    %1408 = vmatpush1.xpose.msra.mxu0 0.0
    %1409 = vmatprep.subr.mxu0 0.0
    %1410 = vmatpush1.xpose.msra.mxu0 0.0
    %1411 = vmatprep.subr.mxu0 0.0
    %1412 = vmatpush1.xpose.msra.mxu0 0.0
    %1413 = vmatprep.subr.mxu0 0.0
    %1414 = vmatpush1.xpose.msra.mxu0 0.0
    %1415 = vmatprep.subr.mxu0 0.0
    %1416 = vmatpush1.xpose.msra.mxu0 0.0
    %1417 = vmatprep.subr.mxu0 0.0
    %1418 = vmatpush1.xpose.msra.mxu0 0.0
    %1419 = vmatprep.subr.mxu0 0.0
    %1420 = vmatpush1.xpose.msra.mxu0 0.0
    %1421 = vmatprep.subr.mxu0 0.0
    %1422 = vmatpush1.xpose.msra.mxu0 0.0
    %1423 = vmatprep.subr.mxu0 0.0
    %1424 = vmatpush1.xpose.msra.mxu0 0.0
    %1425 = vmatprep.subr.mxu0 0.0
    %1426 = vmatpush1.xpose.msra.mxu0 0.0
    %1427 = vmatprep.subr.mxu0 0.0
    %1428 = vmatpush1.xpose.msra.mxu0 0.0
    %1429 = vmatprep.subr.mxu0 0.0
    %1430 = vmatpush1.xpose.msra.mxu0 0.0
    %1431 = vmatprep.subr.mxu0 0.0
    %1432 = vmatpush1.xpose.msra.mxu0 0.0
    %1433 = vmatprep.subr.mxu0 0.0
    %1434 = vmatpush1.xpose.msra.mxu0 0.0
    %1435 = vmatprep.subr.mxu0 0.0
    %1436 = vmatpush1.xpose.msra.mxu0 0.0
    %1437 = vmatprep.subr.mxu0 0.0
    %1438 = vmatpush1.xpose.msra.mxu0 0.0
    %1439 = vmatprep.subr.mxu0 0.0
    %1440 = vmatpush1.xpose.msra.mxu0 0.0
    %1441 = vmatprep.subr.mxu0 0.0
    %1442 = vmatpush1.xpose.msra.mxu0 0.0
    %1443 = vmatprep.subr.mxu0 0.0
    %1444 = vmatpush1.xpose.msra.mxu0 0.0
    %1445 = vmatprep.subr.mxu0 0.0
    %1446 = vmatpush1.xpose.msra.mxu0 0.0
    %1447 = vmatprep.subr.mxu0 0.0
    %1448 = vmatpush1.xpose.msra.mxu0 0.0
    %1449 = vmatprep.mubr.f32.mxu0 0.0
    %1450 = vmatmul.mubr.f32.gmra.mrb[0].mxu0 %v1381
    %v1451 = vpop.f32.mrb[0].mxu0
    %v1452 = vadd.f32 0.0, %v1451
    %v1453 = vpop.f32.mrb[0].mxu0
    %1454 = vdwg.mxu0
    %v1455 = vmul.f32 %v1374, 0.25
    %v1456 = vmul.f32 %v1452, 0.25
    %v1457 = vsel %vm464, %v1455, -inf
    %1458 = vmax.xlane.f32.xlu0 %v1457
    %v1459 = vpop.xlane.xlu0 %1458
    %v1460 = vsel %vm464, %v1456, -inf
    %1461 = vmax.xlane.f32.xlu0 %v1460
    %v1462 = vpop.xlane.xlu0 %1461
    %v1463 = vsub.f32 %v1455, %v1459
    %v1464 = vsub.f32 %v1456, %v1462
    %v1465 = vmul.f32 %v1463, 1.442695
    %v1466 = vpow.pop %v1465
    %v1467 = vmul.f32 %v1464, 1.442695
    %v1468 = vpow.pop %v1467
    %v1469 = vsel %vm464, %v1466, 0.0
    %1470 = vadd.xlane.f32.xlu0 %v1469
    %v1471 = vpop.xlane.xlu0 %1470
    %v1472 = vsel %vm464, %v1468, 0.0
    %1473 = vadd.xlane.f32.xlu0 %v1472
    %v1474 = vpop.xlane.xlu0 %1473
    %v1475 = vrcp.pop %v1471
    %v1476 = vmul.f32 %v1466, %v1475
    %v1477 = vrcp.pop %v1474
    %v1478 = vmul.f32 %v1468, %v1477
    %1479 = vrot.lane.b32.xlu0 %v301, 80
    %v1480 = vpop.permute.xlu0 %1479
    %v1483 = vsel %vm464, %v1476, 0
    %1485 = vmatprep.subr.mxu0 0.0
    %1486 = vmatpush1.msra.mxu0 %v1480
    %1487 = vmatprep.subr.mxu0 0.0
    %1488 = vmatpush1.msra.mxu0 0.0
    %1489 = vmatprep.subr.mxu0 0.0
    %1490 = vmatpush1.msra.mxu0 0.0
    %1491 = vmatprep.subr.mxu0 0.0
    %1492 = vmatpush1.msra.mxu0 0.0
    %1493 = vmatprep.subr.mxu0 0.0
    %1494 = vmatpush1.msra.mxu0 0.0
    %1495 = vmatprep.subr.mxu0 0.0
    %1496 = vmatpush1.msra.mxu0 0.0
    %1497 = vmatprep.subr.mxu0 0.0
    %1498 = vmatpush1.msra.mxu0 0.0
    %1499 = vmatprep.subr.mxu0 0.0
    %1500 = vmatpush1.msra.mxu0 0.0
    %1501 = vmatprep.subr.mxu0 0.0
    %1502 = vmatpush1.msra.mxu0 0.0
    %1503 = vmatprep.subr.mxu0 0.0
    %1504 = vmatpush1.msra.mxu0 0.0
    %1505 = vmatprep.subr.mxu0 0.0
    %1506 = vmatpush1.msra.mxu0 0.0
    %1507 = vmatprep.subr.mxu0 0.0
    %1508 = vmatpush1.msra.mxu0 0.0
    %1509 = vmatprep.subr.mxu0 0.0
    %1510 = vmatpush1.msra.mxu0 0.0
    %1511 = vmatprep.subr.mxu0 0.0
    %1512 = vmatpush1.msra.mxu0 0.0
    %1513 = vmatprep.subr.mxu0 0.0
    %1514 = vmatpush1.msra.mxu0 0.0
    %1515 = vmatprep.subr.mxu0 0.0
    %1516 = vmatpush1.msra.mxu0 0.0
    %1517 = vmatprep.subr.mxu0 0.0
    %1518 = vmatpush1.msra.mxu0 0.0
    %1519 = vmatprep.subr.mxu0 0.0
    %1520 = vmatpush1.msra.mxu0 0.0
    %1521 = vmatprep.subr.mxu0 0.0
    %1522 = vmatpush1.msra.mxu0 0.0
    %1523 = vmatprep.subr.mxu0 0.0
    %1524 = vmatpush1.msra.mxu0 0.0
    %1525 = vmatprep.subr.mxu0 0.0
    %1526 = vmatpush1.msra.mxu0 0.0
    %1527 = vmatprep.subr.mxu0 0.0
    %1528 = vmatpush1.msra.mxu0 0.0
    %1529 = vmatprep.subr.mxu0 0.0
    %1530 = vmatpush1.msra.mxu0 0.0
    %1531 = vmatprep.subr.mxu0 0.0
    %1532 = vmatpush1.msra.mxu0 0.0
    %1533 = vmatprep.subr.mxu0 0.0
    %1534 = vmatpush1.msra.mxu0 0.0
    %1535 = vmatprep.subr.mxu0 0.0
    %1536 = vmatpush1.msra.mxu0 0.0
    %1537 = vmatprep.subr.mxu0 0.0
    %1538 = vmatpush1.msra.mxu0 0.0
    %1539 = vmatprep.subr.mxu0 0.0
    %1540 = vmatpush1.msra.mxu0 0.0
    %1541 = vmatprep.subr.mxu0 0.0
    %1542 = vmatpush1.msra.mxu0 0.0
    %1543 = vmatprep.subr.mxu0 0.0
    %1544 = vmatpush1.msra.mxu0 0.0
    %1545 = vmatprep.subr.mxu0 0.0
    %1546 = vmatpush1.msra.mxu0 0.0
    %1547 = vmatprep.subr.mxu0 0.0
    %1548 = vmatpush1.msra.mxu0 0.0
    %1549 = vmatprep.mubr.f32.mxu0 0.0
    %1550 = vmatmul.mubr.f32.gmra.mrb[0].mxu0 %v1483
    %v1551 = vpop.f32.mrb[0].mxu0
    %v1552 = vadd.f32 0.0, %v1551
    %v1553 = vpop.f32.mrb[0].mxu0
    %1554 = vdwg.mxu0
    %1555 = vrot.lane.b32.xlu0 %v306, 80
    %v1556 = vpop.permute.xlu0 %1555
    %v1559 = vsel %vm464, %v1478, 0
    %1561 = vmatprep.subr.mxu0 0.0
    %1562 = vmatpush1.msra.mxu0 %v1556
    %1563 = vmatprep.subr.mxu0 0.0
    %1564 = vmatpush1.msra.mxu0 0.0
    %1565 = vmatprep.subr.mxu0 0.0
    %1566 = vmatpush1.msra.mxu0 0.0
    %1567 = vmatprep.subr.mxu0 0.0
    %1568 = vmatpush1.msra.mxu0 0.0
    %1569 = vmatprep.subr.mxu0 0.0
    %1570 = vmatpush1.msra.mxu0 0.0
    %1571 = vmatprep.subr.mxu0 0.0
    %1572 = vmatpush1.msra.mxu0 0.0
    %1573 = vmatprep.subr.mxu0 0.0
    %1574 = vmatpush1.msra.mxu0 0.0
    %1575 = vmatprep.subr.mxu0 0.0
    %1576 = vmatpush1.msra.mxu0 0.0
    %1577 = vmatprep.subr.mxu0 0.0
    %1578 = vmatpush1.msra.mxu0 0.0
    %1579 = vmatprep.subr.mxu0 0.0
    %1580 = vmatpush1.msra.mxu0 0.0
    %1581 = vmatprep.subr.mxu0 0.0
    %1582 = vmatpush1.msra.mxu0 0.0
    %1583 = vmatprep.subr.mxu0 0.0
    %1584 = vmatpush1.msra.mxu0 0.0
    %1585 = vmatprep.subr.mxu0 0.0
    %1586 = vmatpush1.msra.mxu0 0.0
    %1587 = vmatprep.subr.mxu0 0.0
    %1588 = vmatpush1.msra.mxu0 0.0
    %1589 = vmatprep.subr.mxu0 0.0
    %1590 = vmatpush1.msra.mxu0 0.0
    %1591 = vmatprep.subr.mxu0 0.0
    %1592 = vmatpush1.msra.mxu0 0.0
    %1593 = vmatprep.subr.mxu0 0.0
    %1594 = vmatpush1.msra.mxu0 0.0
    %1595 = vmatprep.subr.mxu0 0.0
    %1596 = vmatpush1.msra.mxu0 0.0
    %1597 = vmatprep.subr.mxu0 0.0
    %1598 = vmatpush1.msra.mxu0 0.0
    %1599 = vmatprep.subr.mxu0 0.0
    %1600 = vmatpush1.msra.mxu0 0.0
    %1601 = vmatprep.subr.mxu0 0.0
    %1602 = vmatpush1.msra.mxu0 0.0
    %1603 = vmatprep.subr.mxu0 0.0
    %1604 = vmatpush1.msra.mxu0 0.0
    %1605 = vmatprep.subr.mxu0 0.0
    %1606 = vmatpush1.msra.mxu0 0.0
    %1607 = vmatprep.subr.mxu0 0.0
    %1608 = vmatpush1.msra.mxu0 0.0
    %1609 = vmatprep.subr.mxu0 0.0
    %1610 = vmatpush1.msra.mxu0 0.0
    %1611 = vmatprep.subr.mxu0 0.0
    %1612 = vmatpush1.msra.mxu0 0.0
    %1613 = vmatprep.subr.mxu0 0.0
    %1614 = vmatpush1.msra.mxu0 0.0
    %1615 = vmatprep.subr.mxu0 0.0
    %1616 = vmatpush1.msra.mxu0 0.0
    %1617 = vmatprep.subr.mxu0 0.0
    %1618 = vmatpush1.msra.mxu0 0.0
    %1619 = vmatprep.subr.mxu0 0.0
    %1620 = vmatpush1.msra.mxu0 0.0
    %1621 = vmatprep.subr.mxu0 0.0
    %1622 = vmatpush1.msra.mxu0 0.0
    %1623 = vmatprep.subr.mxu0 0.0
    %1624 = vmatpush1.msra.mxu0 0.0
    %1625 = vmatprep.mubr.f32.mxu0 0.0
    %1626 = vmatmul.mubr.f32.gmra.mrb[0].mxu0 %v1559
    %v1627 = vpop.f32.mrb[0].mxu0
    %v1628 = vadd.f32 0.0, %v1627
    %v1629 = vpop.f32.mrb[0].mxu0
    %1630 = vdwg.mxu0
    %1633 = vrot.lane.b32.xlu0 %v887, 16
    %v1634 = vpop.permute.xlu0 %1633
    %1635 = vrot.lane.b32.xlu0 %v964, 16
    %v1636 = vpop.permute.xlu0 %1635
    %1641 = vrot.lane.b32.xlu0 %v1220, 32
    %v1642 = vpop.permute.xlu0 %1641
    %1643 = vrot.lane.b32.xlu0 %v1296, 32
    %v1644 = vpop.permute.xlu0 %1643
    %1649 = vrot.lane.b32.xlu0 %v1552, 48
    %v1650 = vpop.permute.xlu0 %1649
    %1651 = vrot.lane.b32.xlu0 %v1628, 48
    %v1652 = vpop.permute.xlu0 %1651
    %v1655 = vsel %vm309, %v557, %v1634
    %v1656 = vsel %vm309, %v630, %v1636
    %v1657 = vsel %vm63, %v1655, %v1642
    %v1658 = vsel %vm63, %v1656, %v1644
    %vm1659 = vcmask 392192
    %v1660 = vsel %vm1659, %v1657, %v1650
    %v1661 = vsel %vm1659, %v1658, %v1652
    %v1662 = vld [vmem:[%s5] sm:$0xff]
    %v1663 = vld [vmem:[%s5 + $0x8] sm:$0xff]
    %v1664 = vld [vmem:[%s5 + $0x10] sm:$0xff]
    %v1665 = vld [vmem:[%s5 + $0x18] sm:$0xff]
    %v1666 = vld [vmem:[%s5 + $0x20] sm:$0xff]
    %v1667 = vld [vmem:[%s5 + $0x28] sm:$0xff]
    %v1668 = vld [vmem:[%s5 + $0x30] sm:$0xff]
    %v1669 = vld [vmem:[%s5 + $0x38] sm:$0xff]
    %v1670 = vld [vmem:[%s6] sm:$0x1]
    %v1672 = vlaneseq
    %v1673 = vshrl.u32 %v1672, 7
    %v1674 = vsub.s32 0, %v1673
    %v1675 = vrot.slane %v1670, %v1674
    %vm1677 = vcmask 523264
    %v1679 = vsel %vm1677, %v1660, 0
    %v1682 = vsel %vm1677, %v1661, 0
    %1684 = vmatprep.subr.mxu0 0.0
    %1685 = vmatpush1.msra.mxu0 %v1662
    %1686 = vmatprep.subr.mxu0 0.0
    %1687 = vmatpush1.msra.mxu0 %v1663
    %1688 = vmatprep.subr.mxu0 0.0
    %1689 = vmatpush1.msra.mxu0 %v1664
    %1690 = vmatprep.subr.mxu0 0.0
    %1691 = vmatpush1.msra.mxu0 %v1665
    %1692 = vmatprep.subr.mxu0 0.0
    %1693 = vmatpush1.msra.mxu0 %v1666
    %1694 = vmatprep.subr.mxu0 0.0
    %1695 = vmatpush1.msra.mxu0 %v1667
    %1696 = vmatprep.subr.mxu0 0.0
    %1697 = vmatpush1.msra.mxu0 %v1668
    %1698 = vmatprep.subr.mxu0 0.0
    %1699 = vmatpush1.msra.mxu0 %v1669
    %1700 = vmatprep.subr.mxu0 0.0
    %1701 = vmatpush1.msra.mxu0 0.0
    %1702 = vmatprep.subr.mxu0 0.0
    %1703 = vmatpush1.msra.mxu0 0.0
    %1704 = vmatprep.subr.mxu0 0.0
    %1705 = vmatpush1.msra.mxu0 0.0
    %1706 = vmatprep.subr.mxu0 0.0
    %1707 = vmatpush1.msra.mxu0 0.0
    %1708 = vmatprep.subr.mxu0 0.0
    %1709 = vmatpush1.msra.mxu0 0.0
    %1710 = vmatprep.subr.mxu0 0.0
    %1711 = vmatpush1.msra.mxu0 0.0
    %1712 = vmatprep.subr.mxu0 0.0
    %1713 = vmatpush1.msra.mxu0 0.0
    %1714 = vmatprep.subr.mxu0 0.0
    %1715 = vmatpush1.msra.mxu0 0.0
    %1716 = vmatprep.subr.mxu0 0.0
    %1717 = vmatpush1.msra.mxu0 0.0
    %1718 = vmatprep.subr.mxu0 0.0
    %1719 = vmatpush1.msra.mxu0 0.0
    %1720 = vmatprep.subr.mxu0 0.0
    %1721 = vmatpush1.msra.mxu0 0.0
    %1722 = vmatprep.subr.mxu0 0.0
    %1723 = vmatpush1.msra.mxu0 0.0
    %1724 = vmatprep.subr.mxu0 0.0
    %1725 = vmatpush1.msra.mxu0 0.0
    %1726 = vmatprep.subr.mxu0 0.0
    %1727 = vmatpush1.msra.mxu0 0.0
    %1728 = vmatprep.subr.mxu0 0.0
    %1729 = vmatpush1.msra.mxu0 0.0
    %1730 = vmatprep.subr.mxu0 0.0
    %1731 = vmatpush1.msra.mxu0 0.0
    %1732 = vmatprep.subr.mxu0 0.0
    %1733 = vmatpush1.msra.mxu0 0.0
    %1734 = vmatprep.subr.mxu0 0.0
    %1735 = vmatpush1.msra.mxu0 0.0
    %1736 = vmatprep.subr.mxu0 0.0
    %1737 = vmatpush1.msra.mxu0 0.0
    %1738 = vmatprep.subr.mxu0 0.0
    %1739 = vmatpush1.msra.mxu0 0.0
    %1740 = vmatprep.subr.mxu0 0.0
    %1741 = vmatpush1.msra.mxu0 0.0
    %1742 = vmatprep.subr.mxu0 0.0
    %1743 = vmatpush1.msra.mxu0 0.0
    %1744 = vmatprep.subr.mxu0 0.0
    %1745 = vmatpush1.msra.mxu0 0.0
    %1746 = vmatprep.subr.mxu0 0.0
    %1747 = vmatpush1.msra.mxu0 0.0
    %1748 = vmatprep.mubr.f32.mxu0 0.0
    %1749 = vmatmul.mubr.f32.gmra.mrb[0].mxu0 %v1679
    %v1750 = vpop.f32.mrb[0].mxu0
    %v1751 = vadd.f32 %v1675, %v1750
    %v1752 = vpop.f32.mrb[0].mxu0
    %1753 = vmatprep.mubr.f32.mxu0 0.0
    %1754 = vmatmul.mubr.f32.gmra.mrb[0].mxu0 %v1682
    %v1755 = vpop.f32.mrb[0].mxu0
    %v1756 = vadd.f32 %v1675, %v1755
    %v1757 = vpop.f32.mrb[0].mxu0
    %1758 = vdwg.mxu0
    %1759 = vst.msk [vmem:[#allocation7] sm:$0xff] %vm63, %v1751
    %1760 = vst.msk [vmem:[#allocation7 + $0x8] sm:$0xff] %vm63, %v1756
    // Predicated region
    $region38: #{tpu_custom_call.1} parent=1 // pred_check
      _
    $region39: #{tpu_custom_call.1} parent=1 // pred_check_branch
      %1762 = sbr.rel (0) target = $region41
    $region40: #{tpu_custom_call.1} parent=1 // pred_region
      %s1764 = ssub.s32 256, 256
      %1765 = vsyncadd [#allocation4], %s1764
      %s1766 = sshll.u32 [#allocation7], 4
      %s1767 = int_to_ptr.vmem [resolvable:$true] %s1766
      %1772 = dma.vmem_to_hbm [thread:$0]  %s1767, 256, %s7, [#allocation4], 128, 128, 8
    $region41: #{tpu_custom_call.1} parent=1 // pred_fallthru
      _
    // Predicated region
    $region42: #{tpu_custom_call.1} parent=1 // pred_check
      _
    $region43: #{tpu_custom_call.1} parent=1 // pred_check_branch
      %1774 = sbr.rel (0) target = $region45
    $region44: #{tpu_custom_call.1} parent=1 // pred_region
      %1775 = dma.done [#allocation4], 256
    $region45: #{tpu_custom_call.1} parent=1 // pred_fallthru
      _
    %1776 = vsyncpa [#allocation3], 1
    %1777 = vsyncpa [#allocation6], 1
    %1778 = vsyncpa [#allocation4], 1

</llo_original>
